<compile_context>
chip_gen: v7x
topology: tpu7x:2x2x1
jax: 0.10.0
libtpu: 0.0.40
codegen_flags: <defaults>
</compile_context>

<pallas_src>
import functools

import jax
import jax.numpy as jnp
from jax import lax
from jax.experimental import pallas as pl
from jax.experimental.pallas import tpu as pltpu

NUM_CLASSES = 86
EPS = 1e-7


def _f1_loss_kernel(y_pred_ref, y_true_ref, tp_ref, sp_ref, cnt_ref,
                    *, n_rows, tile_n, steps_per_core, any_partial):
    c = pl.program_id(0)          # core-split axis ("parallel")
    s = pl.program_id(1)          # per-core reduction step ("arbitrary")

    @pl.when(s == 0)
    def _init():
        tp_ref[...] = jnp.zeros_like(tp_ref)
        sp_ref[...] = jnp.zeros_like(sp_ref)
        cnt_ref[...] = jnp.zeros_like(cnt_ref)

    labels = y_true_ref[...]                                        # (tile_n, 1) i32
    class_ids = lax.broadcasted_iota(jnp.int32, (tile_n, NUM_CLASSES), 1)
    ones_lhs = jnp.ones((8, tile_n), jnp.float32)                   # MXU lhs

    def col_reduce(x):
        # (tile_n, C) -> (8, C) partial column sums on the (idle) MXU slot.
        return jnp.dot(ones_lhs, x,
                       precision=lax.Precision.HIGHEST,
                       preferred_element_type=jnp.float32)

    def accumulate(logits, onehot, row_mask):
        # Softmax along the class (lane) axis; only tile_n reciprocals on EUP.
        m = jnp.max(logits, axis=1, keepdims=True)
        e = jnp.exp(logits - m)
        p = e * pl.reciprocal(jnp.sum(e, axis=1, keepdims=True))
        p_src = p if row_mask is None else p * row_mask
        tp_ref[...] += col_reduce(onehot * p)
        sp_ref[...] += col_reduce(p_src)                            # sum of p
        cnt_ref[...] += col_reduce(onehot)                          # class counts

    def full_tile():
        logits = y_pred_ref[...].astype(jnp.float32)
        onehot = (class_ids == labels).astype(jnp.float32)
        accumulate(logits, onehot, None)

    if not any_partial:
        # Static: every grid step covers exactly tile_n valid rows.
        full_tile()
    else:
        row_start = (c * steps_per_core + s) * tile_n               # unclamped
        is_full = (row_start + tile_n) <= n_rows

        pl.when(is_full)(full_tile)

        @pl.when(jnp.logical_not(is_full))
        def _partial_tile():
            # Ragged last tile and/or fully-out-of-range duplicated blocks:
            # mask by global row index so they contribute exactly zero.
            logits = y_pred_ref[...].astype(jnp.float32)
            row_ids = lax.broadcasted_iota(jnp.int32, (tile_n, 1), 0) + row_start
            row_valid = row_ids < n_rows
            logits = jnp.where(row_valid, logits, 0.0)              # kill garbage rows
            onehot = jnp.logical_and(class_ids == labels,
                                     row_valid).astype(jnp.float32)
            accumulate(logits, onehot, row_valid.astype(jnp.float32))


def f1_loss(y_pred, y_true, tile_n=None):
    """y_pred: (N, 86) float logits (any float dtype), y_true: (N,) int labels."""
    assert y_pred.ndim == 2 and y_pred.shape[1] == NUM_CLASSES
    assert y_true.ndim == 1 and y_true.shape[0] == y_pred.shape[0]
    n = y_pred.shape[0]

    # Logits are streamed in their native dtype (no wrapper-side f32 cast).
    y_true_2d = y_true.astype(jnp.int32).reshape(n, 1)

    if tile_n is None:
        tile_n = 4096                      # ~1.4 MB/step f32 logits: amortizes step overhead
    tile_n = min(tile_n, n)
    if tile_n < n:
        tile_n = max(16, (tile_n // 16) * 16)   # multiple of 16: bf16 sublane packing

    grid_n = pl.cdiv(n, tile_n)                 # total row blocks
    num_cores = 2 if grid_n >= 2 else 1         # v7x: shard batch over both TCs
    steps = pl.cdiv(grid_n, num_cores)
    # True iff some step has rows to mask (ragged last block or duplicated
    # clamped blocks when the split is uneven).
    any_partial = (num_cores * steps * tile_n) != n

    def row_block(c, s):
        # Clamp so we never DMA a block that starts past the array end; the
        # kernel masks the duplicated rows (they contribute zero).
        return (jnp.minimum(c * steps + s, grid_n - 1), 0)

    kernel = functools.partial(
        _f1_loss_kernel, n_rows=n, tile_n=tile_n,
        steps_per_core=steps, any_partial=any_partial)

    part_shape = jax.ShapeDtypeStruct((num_cores, 8, NUM_CLASSES), jnp.float32)
    part_spec = pl.BlockSpec((None, 8, NUM_CLASSES), lambda c, s: (c, 0, 0))

    tp_p, sp_p, cnt_p = pl.pallas_call(
        kernel,
        out_shape=(part_shape, part_shape, part_shape),
        grid_spec=pltpu.PrefetchScalarGridSpec(
            num_scalar_prefetch=0,
            grid=(num_cores, steps),
            in_specs=[
                pl.BlockSpec((tile_n, NUM_CLASSES), row_block),
                pl.BlockSpec((tile_n, 1), row_block),
            ],
            out_specs=(part_spec, part_spec, part_spec),
        ),
        compiler_params=pltpu.CompilerParams(
            dimension_semantics=("parallel", "arbitrary"),
            vmem_limit_bytes=32 * 1024 * 1024),
    )(y_pred, y_true_2d)

    # Tiny finalize in plain JAX: combine per-core (8, 86) partials.
    tp = jnp.sum(tp_p, axis=(0, 1))
    sum_p = jnp.sum(sp_p, axis=(0, 1))
    cnt = jnp.sum(cnt_p, axis=(0, 1))
    fp = sum_p - tp                              # == sum((1 - onehot) * p)
    fn = cnt - tp                                # == sum(onehot * (1 - p))
    # note: tn is computed but unused in the reference module; skipped.
    precision = tp / (tp + fp + EPS)
    recall = tp / (tp + fn + EPS)
    f1 = 2.0 * precision * recall / (precision + recall + EPS)
    f1 = jnp.clip(f1, EPS, 1.0 - EPS)
    return 1.0 - jnp.mean(f1)


def f1_loss_ref(y_pred, y_true):
    """Pure-JAX reference mirroring the PyTorch module."""
    y_onehot = jax.nn.one_hot(y_true, NUM_CLASSES, dtype=jnp.float32)
    p = jax.nn.softmax(y_pred.astype(jnp.float32), axis=1)
    tp = jnp.sum(y_onehot * p, axis=0)
    fp = jnp.sum((1 - y_onehot) * p, axis=0)
    fn = jnp.sum(y_onehot * (1 - p), axis=0)
    precision = tp / (tp + fp + EPS)
    recall = tp / (tp + fn + EPS)
    f1 = 2 * (precision * recall) / (precision + recall + EPS)
    f1 = jnp.clip(f1, EPS, 1 - EPS)
    return 1 - jnp.mean(f1)


if __name__ == "__main__":
    key = jax.random.PRNGKey(0)
    k1, k2 = jax.random.split(key)

    # Test 1: single-tile, single-core path (no masking).
    n = 64
    y_pred = jax.random.normal(k1, (n, NUM_CLASSES), dtype=jnp.float32)
    y_true = jax.random.randint(k2, (n,), 0, NUM_CLASSES, dtype=jnp.int32)

    loss = jax.block_until_ready(f1_loss(y_pred, y_true))
    loss_ref = jax.block_until_ready(f1_loss_ref(y_pred, y_true))
    assert jnp.allclose(loss, loss_ref, atol=1e-4, rtol=1e-4), (loss, loss_ref)

    # Test 2: multi-tile, 2-core-split path with a ragged (masked) last tile.
    n2 = 50
    yp2, yt2 = y_pred[:n2], y_true[:n2]
    loss2 = jax.block_until_ready(f1_loss(yp2, yt2, tile_n=16))
    loss2_ref = jax.block_until_ready(f1_loss_ref(yp2, yt2))
    assert jnp.allclose(loss2, loss2_ref, atol=1e-4, rtol=1e-4), (loss2, loss2_ref)

    # Test 3: bf16 logits streamed natively (no wrapper cast), uneven core split
    # (3 row blocks over 2 cores -> one fully-masked duplicated block).
    n3 = 80
    k3, k4 = jax.random.split(k1)
    yp3 = jax.random.normal(k3, (n3, NUM_CLASSES), dtype=jnp.float32).astype(jnp.bfloat16)
    yt3 = jax.random.randint(k4, (n3,), 0, NUM_CLASSES, dtype=jnp.int32)
    loss3 = jax.block_until_ready(f1_loss(yp3, yt3, tile_n=32))
    loss3_ref = jax.block_until_ready(f1_loss_ref(yp3.astype(jnp.float32), yt3))
    assert jnp.allclose(loss3, loss3_ref, atol=1e-4, rtol=1e-4), (loss3, loss3_ref)

    print("KERNEL_OK")
</pallas_src>

<mosaic_0001>
module attributes {stable_mosaic.version = 11 : i64} {
  func.func @_f1_loss_kernel(%arg0: i32, %arg1: i32, %arg2: memref<64x86xf32, #tpu.memory_space<vmem>>, %arg3: memref<64x1xi32, #tpu.memory_space<vmem>>, %arg4: memref<1x8x86xf32, #tpu.memory_space<vmem>>, %arg5: memref<1x8x86xf32, #tpu.memory_space<vmem>>, %arg6: memref<1x8x86xf32, #tpu.memory_space<vmem>>) attributes {dimension_semantics = [#tpu.dimension_semantics<parallel>, #tpu.dimension_semantics<arbitrary>], iteration_bounds = array<i64: 1, 1>, scalar_prefetch = 0 : i64, scratch_operands = 0 : i64, tpu.core_type = #tpu.core_type<tc>, window_params = [{transform_indices = @transform_0, window_bounds = array<i64: 64, 86>}, {transform_indices = @transform_1, window_bounds = array<i64: 64, 1>}, {transform_indices = @transform_2, window_bounds = array<i64: 1, 8, 86>}, {transform_indices = @transform_3, window_bounds = array<i64: 1, 8, 86>}, {transform_indices = @transform_4, window_bounds = array<i64: 1, 8, 86>}]} {
    %c0_i32 = arith.constant 0 : i32
    %0 = arith.cmpi eq, %arg1, %c0_i32 : i32
    %1 = arith.extui %0 : i1 to i32
    %c0_i32_0 = arith.constant 0 : i32
    %2 = arith.cmpi ne, %1, %c0_i32_0 : i32
    scf.if %2 {
      %cst_27 = arith.constant 0.000000e+00 : f32
      %43 = vector.broadcast %cst_27 : f32 to vector<8x86xf32>
      %c0_28 = arith.constant 0 : index
      %c0_29 = arith.constant 0 : index
      %c0_30 = arith.constant 0 : index
      %44 = vector.load %arg4[%c0_28, %c0_29, %c0_30] : memref<1x8x86xf32, #tpu.memory_space<vmem>>, vector<1x8x86xf32>
      %45 = vector.shape_cast %44 : vector<1x8x86xf32> to vector<8x86xf32>
      %46 = vector.shape_cast %43 : vector<8x86xf32> to vector<1x8x86xf32>
      tpu.vector_store %arg4[%c0_28, %c0_29, %c0_30], %46 {strides = array<i32>} : memref<1x8x86xf32, #tpu.memory_space<vmem>>, vector<1x8x86xf32>,
      %cst_31 = arith.constant 0.000000e+00 : f32
      %47 = vector.broadcast %cst_31 : f32 to vector<8x86xf32>
      %c0_32 = arith.constant 0 : index
      %c0_33 = arith.constant 0 : index
      %c0_34 = arith.constant 0 : index
      %48 = vector.load %arg5[%c0_32, %c0_33, %c0_34] : memref<1x8x86xf32, #tpu.memory_space<vmem>>, vector<1x8x86xf32>
      %49 = vector.shape_cast %48 : vector<1x8x86xf32> to vector<8x86xf32>
      %50 = vector.shape_cast %47 : vector<8x86xf32> to vector<1x8x86xf32>
      tpu.vector_store %arg5[%c0_32, %c0_33, %c0_34], %50 {strides = array<i32>} : memref<1x8x86xf32, #tpu.memory_space<vmem>>, vector<1x8x86xf32>,
      %cst_35 = arith.constant 0.000000e+00 : f32
      %51 = vector.broadcast %cst_35 : f32 to vector<8x86xf32>
      %c0_36 = arith.constant 0 : index
      %c0_37 = arith.constant 0 : index
      %c0_38 = arith.constant 0 : index
      %52 = vector.load %arg6[%c0_36, %c0_37, %c0_38] : memref<1x8x86xf32, #tpu.memory_space<vmem>>, vector<1x8x86xf32>
      %53 = vector.shape_cast %52 : vector<1x8x86xf32> to vector<8x86xf32>
      %54 = vector.shape_cast %51 : vector<8x86xf32> to vector<1x8x86xf32>
      tpu.vector_store %arg6[%c0_36, %c0_37, %c0_38], %54 {strides = array<i32>} : memref<1x8x86xf32, #tpu.memory_space<vmem>>, vector<1x8x86xf32>,
    } else {
    }
    %c0 = arith.constant 0 : index
    %c0_1 = arith.constant 0 : index
    %3 = vector.load %arg3[%c0, %c0_1] : memref<64x1xi32, #tpu.memory_space<vmem>>, vector<64x1xi32>
    %4 = tpu.iota {dimensions = array<i32: 1>} : vector<64x86xi32>
    %cst = arith.constant 1.000000e+00 : f32
    %5 = vector.broadcast %cst : f32 to vector<8x64xf32>
    %c0_2 = arith.constant 0 : index
    %c0_3 = arith.constant 0 : index
    %6 = vector.load %arg2[%c0_2, %c0_3] : memref<64x86xf32, #tpu.memory_space<vmem>>, vector<64x86xf32>
    %7 = vector.broadcast %3 : vector<64x1xi32> to vector<64x86xi32>
    %8 = arith.cmpi eq, %4, %7 : vector<64x86xi32>
    %9 = arith.extui %8 : vector<64x86xi1> to vector<64x86xi32>
    %10 = arith.sitofp %9 : vector<64x86xi32> to vector<64x86xf32>
    %cst_4 = arith.constant dense<0xFF800000> : vector<64xf32>
    %11 = vector.multi_reduction <maximumf>, %6, %cst_4 [1] : vector<64x86xf32> to vector<64xf32>
    %12 = vector.shape_cast %11 : vector<64xf32> to vector<64x1xf32>
    %13 = vector.broadcast %12 : vector<64x1xf32> to vector<64x86xf32>
    %14 = arith.subf %6, %13 : vector<64x86xf32>
    %15 = math.exp %14 : vector<64x86xf32>
    %cst_5 = arith.constant dense<0.000000e+00> : vector<64xf32>
    %16 = vector.multi_reduction <add>, %15, %cst_5 [1] : vector<64x86xf32> to vector<64xf32>
    %17 = vector.shape_cast %16 : vector<64xf32> to vector<64x1xf32>
    %18 = tpu.reciprocal %17 : vector<64x1xf32> -> vector<64x1xf32>
    %19 = vector.broadcast %18 : vector<64x1xf32> to vector<64x86xf32>
    %20 = arith.mulf %15, %19 : vector<64x86xf32>
    %c0_6 = arith.constant 0 : index
    %c0_7 = arith.constant 0 : index
    %c0_8 = arith.constant 0 : index
    %21 = vector.load %arg4[%c0_6, %c0_7, %c0_8] : memref<1x8x86xf32, #tpu.memory_space<vmem>>, vector<1x8x86xf32>
    %22 = vector.shape_cast %21 : vector<1x8x86xf32> to vector<8x86xf32>
    %23 = arith.mulf %10, %20 : vector<64x86xf32>
    %cst_9 = arith.constant dense<0.000000e+00> : vector<8x86xf32>
    %24 = tpu.matmul %5, %23, %cst_9 {dimension_numbers = #tpu.dot_dimension_numbers<[1], [0], [0], [1], [0, 0, 1, 1], [], []>, precision = #tpu.contract_precision<fp32>} : vector<8x64xf32>, vector<64x86xf32>, vector<8x86xf32> -> vector<8x86xf32>
    %25 = arith.addf %22, %24 : vector<8x86xf32>
    %c0_10 = arith.constant 0 : index
    %c0_11 = arith.constant 0 : index
    %c0_12 = arith.constant 0 : index
    %26 = vector.load %arg4[%c0_10, %c0_11, %c0_12] : memref<1x8x86xf32, #tpu.memory_space<vmem>>, vector<1x8x86xf32>
    %27 = vector.shape_cast %26 : vector<1x8x86xf32> to vector<8x86xf32>
    %28 = vector.shape_cast %25 : vector<8x86xf32> to vector<1x8x86xf32>
    tpu.vector_store %arg4[%c0_10, %c0_11, %c0_12], %28 {strides = array<i32>} : memref<1x8x86xf32, #tpu.memory_space<vmem>>, vector<1x8x86xf32>,
    %c0_13 = arith.constant 0 : index
    %c0_14 = arith.constant 0 : index
    %c0_15 = arith.constant 0 : index
    %29 = vector.load %arg5[%c0_13, %c0_14, %c0_15] : memref<1x8x86xf32, #tpu.memory_space<vmem>>, vector<1x8x86xf32>
    %30 = vector.shape_cast %29 : vector<1x8x86xf32> to vector<8x86xf32>
    %cst_16 = arith.constant dense<0.000000e+00> : vector<8x86xf32>
    %31 = tpu.matmul %5, %20, %cst_16 {dimension_numbers = #tpu.dot_dimension_numbers<[1], [0], [0], [1], [0, 0, 1, 1], [], []>, precision = #tpu.contract_precision<fp32>} : vector<8x64xf32>, vector<64x86xf32>, vector<8x86xf32> -> vector<8x86xf32>
    %32 = arith.addf %30, %31 : vector<8x86xf32>
    %c0_17 = arith.constant 0 : index
    %c0_18 = arith.constant 0 : index
    %c0_19 = arith.constant 0 : index
    %33 = vector.load %arg5[%c0_17, %c0_18, %c0_19] : memref<1x8x86xf32, #tpu.memory_space<vmem>>, vector<1x8x86xf32>
    %34 = vector.shape_cast %33 : vector<1x8x86xf32> to vector<8x86xf32>
    %35 = vector.shape_cast %32 : vector<8x86xf32> to vector<1x8x86xf32>
    tpu.vector_store %arg5[%c0_17, %c0_18, %c0_19], %35 {strides = array<i32>} : memref<1x8x86xf32, #tpu.memory_space<vmem>>, vector<1x8x86xf32>,
    %c0_20 = arith.constant 0 : index
    %c0_21 = arith.constant 0 : index
    %c0_22 = arith.constant 0 : index
    %36 = vector.load %arg6[%c0_20, %c0_21, %c0_22] : memref<1x8x86xf32, #tpu.memory_space<vmem>>, vector<1x8x86xf32>
    %37 = vector.shape_cast %36 : vector<1x8x86xf32> to vector<8x86xf32>
    %cst_23 = arith.constant dense<0.000000e+00> : vector<8x86xf32>
    %38 = tpu.matmul %5, %10, %cst_23 {dimension_numbers = #tpu.dot_dimension_numbers<[1], [0], [0], [1], [0, 0, 1, 1], [], []>, precision = #tpu.contract_precision<fp32>} : vector<8x64xf32>, vector<64x86xf32>, vector<8x86xf32> -> vector<8x86xf32>
    %39 = arith.addf %37, %38 : vector<8x86xf32>
    %c0_24 = arith.constant 0 : index
    %c0_25 = arith.constant 0 : index
    %c0_26 = arith.constant 0 : index
    %40 = vector.load %arg6[%c0_24, %c0_25, %c0_26] : memref<1x8x86xf32, #tpu.memory_space<vmem>>, vector<1x8x86xf32>
    %41 = vector.shape_cast %40 : vector<1x8x86xf32> to vector<8x86xf32>
    %42 = vector.shape_cast %39 : vector<8x86xf32> to vector<1x8x86xf32>
    tpu.vector_store %arg6[%c0_24, %c0_25, %c0_26], %42 {strides = array<i32>} : memref<1x8x86xf32, #tpu.memory_space<vmem>>, vector<1x8x86xf32>,
    return
  }
  func.func @transform_0(%arg0: i32, %arg1: i32) -> (i32, i32) {
    %c1_i32 = arith.constant 1 : i32
    %0 = arith.muli %arg0, %c1_i32 : i32
    %1 = arith.addi %0, %arg1 : i32
    %c0_i32 = arith.constant 0 : i32
    %2 = arith.minsi %1, %c0_i32 : i32
    %c0_i32_0 = arith.constant 0 : i32
    %c0_i32_1 = arith.constant 0 : i32
    return %2, %c0_i32_0 : i32, i32
  }
  func.func @transform_1(%arg0: i32, %arg1: i32) -> (i32, i32) {
    %c1_i32 = arith.constant 1 : i32
    %0 = arith.muli %arg0, %c1_i32 : i32
    %1 = arith.addi %0, %arg1 : i32
    %c0_i32 = arith.constant 0 : i32
    %2 = arith.minsi %1, %c0_i32 : i32
    %c0_i32_0 = arith.constant 0 : i32
    %c0_i32_1 = arith.constant 0 : i32
    return %2, %c0_i32_0 : i32, i32
  }
  func.func @transform_2(%arg0: i32, %arg1: i32) -> (i32, i32, i32) {
    %c0_i32 = arith.constant 0 : i32
    %c0_i32_0 = arith.constant 0 : i32
    %c0_i32_1 = arith.constant 0 : i32
    return %arg0, %c0_i32, %c0_i32_0 : i32, i32, i32
  }
  func.func @transform_3(%arg0: i32, %arg1: i32) -> (i32, i32, i32) {
    %c0_i32 = arith.constant 0 : i32
    %c0_i32_0 = arith.constant 0 : i32
    %c0_i32_1 = arith.constant 0 : i32
    return %arg0, %c0_i32, %c0_i32_0 : i32, i32, i32
  }
  func.func @transform_4(%arg0: i32, %arg1: i32) -> (i32, i32, i32) {
    %c0_i32 = arith.constant 0 : i32
    %c0_i32_0 = arith.constant 0 : i32
    %c0_i32_1 = arith.constant 0 : i32
    return %arg0, %c0_i32, %c0_i32_0 : i32, i32, i32
  }
}

</mosaic_0001>

<llo_original>
// kernel: tpu_custom_call.1
$region0: #{tpu_custom_call.1}
  #allocation0 [shape = 'u32[]', space=smem, size = 0x4, offset = 0x4, fixed_abs, tag = 'smem constant byte address 0x4 - core index']
  #allocation1 [shape = 'u32[144,128]{1,0:T(1,128)}', space=vmem, size = 0x12000, scoped, tag = 'internal scratch']
  %s0 = inlined_call_operand.vmem [shape: f32[64,86], index: 0, kind: input, shape index: {}]
  %s1 = inlined_call_operand.vmem [shape: s32[64,1], index: 1, kind: input, shape index: {}]
  %s2 = inlined_call_operand.hbm [shape: f32[1,8,86], index: 2, kind: output, shape index: {0}]
  %s3 = inlined_call_operand.hbm [shape: f32[1,8,86], index: 3, kind: output, shape index: {1}]
  %s4 = inlined_call_operand.hbm [shape: f32[1,8,86], index: 4, kind: output, shape index: {2}]
  %5 = xla_tuple %s2, %s3, %s4
  %s6 = sld [smem:[#allocation0]]
  $region38: #{tpu_custom_call.1} parent=0
    _
  %s8 = ssub.s32 1, %s6
  %s9 = scalar_select 0, %s8, %s6
  $region1: #{tpu_custom_call.1} parent=0
    #allocation2 [shape = 'u8[4096]{0}', space=vmem, size = 0x1000, scoped, tag = 'output window, operand 0, single buffered']
    #allocation3 [shape = 's32[1]{0}', space=sflag, size = 0x4, scoped, tag = 'scoped memory for tpu_custom_call.1']
    #allocation4 [shape = 'u8[4096]{0}', space=vmem, size = 0x1000, scoped, tag = 'output window, operand 1, single buffered']
    #allocation5 [shape = 's32[1]{0}', space=sflag, size = 0x4, scoped, tag = 'scoped memory for tpu_custom_call.1']
    #allocation6 [shape = 'u8[4096]{0}', space=vmem, size = 0x1000, scoped, tag = 'output window, operand 2, single buffered']
    %10 = vsyncpa [#allocation3], 0
    %11 = vsyncpa [#allocation5], 0
    // Predicated region
    $region2: #{tpu_custom_call.1} parent=1 // pred_check
      _
    $region3: #{tpu_custom_call.1} parent=1 // pred_check_branch
      %13 = sbr.rel (0) target = $region5
    $region4: #{tpu_custom_call.1} parent=1 // pred_region
      %s14 = sadd.s32 0, 0
      %p15 = scmp.lt.s32.totalorder %s14, 0
      %s16 = scalar_select %p15, %s14, 0
      %s17 = smul.u32 8, %s16
      %p18 = scmp.lt.s32.totalorder %s17, 7
      %s19 = scalar_select %p18, %s17, 7
      %s20 = smul.addr %s19, 8
      %s21 = scalar_lea.vmem %s0, %s20
      %s22 = sadd.s32 0, 0
      %p23 = scmp.lt.s32.totalorder %s22, 0
      %s24 = scalar_select %p23, %s22, 0
      %s25 = smul.u32 8, %s24
    $region5: #{tpu_custom_call.1} parent=1 // pred_fallthru
      _
    // Predicated region
    $region6: #{tpu_custom_call.1} parent=1 // pred_check
      _
    $region7: #{tpu_custom_call.1} parent=1 // pred_check_branch
      %27 = sbr.rel (0) target = $region9
    $region8: #{tpu_custom_call.1} parent=1 // pred_region
      %s28 = sadd.s32 0, 0
      %p29 = scmp.lt.s32.totalorder %s28, 0
      %s30 = scalar_select %p29, %s28, 0
      %s31 = smul.u32 8, %s30
      %p32 = scmp.lt.s32.totalorder %s31, 7
      %s33 = scalar_select %p32, %s31, 7
      %s34 = smul.addr %s33, 8
      %s35 = scalar_lea.vmem %s1, %s34
      %s36 = sadd.s32 0, 0
      %p37 = scmp.lt.s32.totalorder %s36, 0
      %s38 = scalar_select %p37, %s36, 0
      %s39 = smul.u32 8, %s38
    $region9: #{tpu_custom_call.1} parent=1 // pred_fallthru
      _
    %s40 = sadd.s32 0, 0
    %p41 = scmp.lt.s32.totalorder %s40, 0
    %s42 = scalar_select %p41, %s40, 0
    %s43 = smul.u32 8, %s42
    %p44 = scmp.lt.s32.totalorder %s43, 7
    %s45 = scalar_select %p44, %s43, 7
    %s46 = smul.addr %s45, 8
    %s47 = scalar_lea.vmem %s0, %s46
    %s48 = sadd.s32 0, 0
    %p49 = scmp.lt.s32.totalorder %s48, 0
    %s50 = scalar_select %p49, %s48, 0
    %s51 = smul.u32 8, %s50
    %p52 = scmp.lt.s32.totalorder %s51, 7
    %s53 = scalar_select %p52, %s51, 7
    %s54 = smul.addr %s53, 8
    %s55 = scalar_lea.vmem %s1, %s54
    %s56 = sadd.s32 0, 0
    %p57 = scmp.lt.s32.totalorder %s56, 0
    %s58 = scalar_select %p57, %s56, 0
    %s59 = smul.u32 8, %s58
    %p60 = scmp.lt.s32.totalorder %s59, 7
    %s61 = scalar_select %p60, %s59, 7
    %s62 = smul.addr %s61, 8
    %s63 = scalar_lea.vmem %s0, %s62
    %s64 = sadd.s32 0, 0
    %p65 = scmp.lt.s32.totalorder %s64, 0
    %s66 = scalar_select %p65, %s64, 0
    %s67 = smul.u32 8, %s66
    %s68 = sadd.s32 0, 0
    %p69 = scmp.lt.s32.totalorder %s68, 0
    %s70 = scalar_select %p69, %s68, 0
    %s71 = smul.u32 8, %s70
    %p72 = scmp.lt.s32.totalorder %s71, 7
    %s73 = scalar_select %p72, %s71, 7
    %s74 = smul.addr %s73, 8
    %s75 = scalar_lea.vmem %s1, %s74
    %s76 = sadd.s32 0, 0
    %p77 = scmp.lt.s32.totalorder %s76, 0
    %s78 = scalar_select %p77, %s76, 0
    %s79 = smul.u32 8, %s78
    %p80 = scmp.eq.s32.totalorder 0, 0
    // Predicated region
    $region10: #{tpu_custom_call.1} parent=1 // pred_check
      %p81 = pneg %p80
    $region11: #{tpu_custom_call.1} parent=1 // pred_check_branch
      %83 = sbr.rel (%p81) target = $region13
    $region12: #{tpu_custom_call.1} parent=1 // pred_region
      %vm84 = vcmask 703488
      %85 = vst.msk [vmem:[#allocation2] sm:$0xff] %vm84, 0.0
      %86 = vst.msk [vmem:[#allocation4] sm:$0xff] %vm84, 0.0
      %87 = vst.msk [vmem:[#allocation6] sm:$0xff] %vm84, 0.0
    $region13: #{tpu_custom_call.1} parent=1 // pred_fallthru
      _
    %v88 = vld [vmem:[%s75] sm:$0xff]
    %v89 = vld [vmem:[%s75 + $0x8] sm:$0xff]
    %v90 = vld [vmem:[%s75 + $0x10] sm:$0xff]
    %v91 = vld [vmem:[%s75 + $0x18] sm:$0xff]
    %v92 = vld [vmem:[%s75 + $0x20] sm:$0xff]
    %v93 = vld [vmem:[%s75 + $0x28] sm:$0xff]
    %v94 = vld [vmem:[%s75 + $0x30] sm:$0xff]
    %v95 = vld [vmem:[%s75 + $0x38] sm:$0xff]
    %v96 = vlaneseq
    %v97 = vand.u32 %v96, 127
    %v98 = vld [vmem:[%s63] sm:$0xff]
    %v99 = vld [vmem:[%s63 + $0x8] sm:$0xff]
    %v100 = vld [vmem:[%s63 + $0x10] sm:$0xff]
    %v101 = vld [vmem:[%s63 + $0x18] sm:$0xff]
    %v102 = vld [vmem:[%s63 + $0x20] sm:$0xff]
    %v103 = vld [vmem:[%s63 + $0x28] sm:$0xff]
    %v104 = vld [vmem:[%s63 + $0x30] sm:$0xff]
    %v105 = vld [vmem:[%s63 + $0x38] sm:$0xff]
    %106 = vset.pattern.permute.xlu0 0
    %107 = vperm.xlu0 %106, %v88
    %v108 = vpop.permute.xlu0 %107
    %109 = vset.pattern.permute.xlu0 0
    %110 = vperm.xlu0 %109, %v89
    %v111 = vpop.permute.xlu0 %110
    %112 = vset.pattern.permute.xlu0 0
    %113 = vperm.xlu0 %112, %v90
    %v114 = vpop.permute.xlu0 %113
    %115 = vset.pattern.permute.xlu0 0
    %116 = vperm.xlu0 %115, %v91
    %v117 = vpop.permute.xlu0 %116
    %118 = vset.pattern.permute.xlu0 0
    %119 = vperm.xlu0 %118, %v92
    %v120 = vpop.permute.xlu0 %119
    %121 = vset.pattern.permute.xlu0 0
    %122 = vperm.xlu0 %121, %v93
    %v123 = vpop.permute.xlu0 %122
    %124 = vset.pattern.permute.xlu0 0
    %125 = vperm.xlu0 %124, %v94
    %v126 = vpop.permute.xlu0 %125
    %127 = vset.pattern.permute.xlu0 0
    %128 = vperm.xlu0 %127, %v95
    %v129 = vpop.permute.xlu0 %128
    %vm130 = vcmp.eq.s32.totalorder %v97, %v108
    %vm131 = vcmp.eq.s32.totalorder %v97, %v111
    %vm132 = vcmp.eq.s32.totalorder %v97, %v114
    %vm133 = vcmp.eq.s32.totalorder %v97, %v117
    %vm134 = vcmp.eq.s32.totalorder %v97, %v120
    %vm135 = vcmp.eq.s32.totalorder %v97, %v123
    %vm136 = vcmp.eq.s32.totalorder %v97, %v126
    %vm137 = vcmp.eq.s32.totalorder %v97, %v129
    %v138 = vsel %vm130, 1, 0
    %v139 = vsel %vm131, 1, 0
    %v140 = vsel %vm132, 1, 0
    %v141 = vsel %vm133, 1, 0
    %v142 = vsel %vm134, 1, 0
    %v143 = vsel %vm135, 1, 0
    %v144 = vsel %vm136, 1, 0
    %v145 = vsel %vm137, 1, 0
    %v146 = vcvt.s32.f32 %v138
    %v147 = vcvt.s32.f32 %v139
    %v148 = vcvt.s32.f32 %v140
    %v149 = vcvt.s32.f32 %v141
    %v150 = vcvt.s32.f32 %v142
    %v151 = vcvt.s32.f32 %v143
    %v152 = vcvt.s32.f32 %v144
    %v153 = vcvt.s32.f32 %v145
    %vm154 = vcmask 703488
    %v155 = vsel %vm154, %v98, -inf
    %156 = vmax.xlane.f32.xlu0 %v155
    %v157 = vpop.xlane.xlu0 %156
    %v158 = vsel %vm154, %v99, -inf
    %159 = vmax.xlane.f32.xlu0 %v158
    %v160 = vpop.xlane.xlu0 %159
    %v161 = vsel %vm154, %v100, -inf
    %162 = vmax.xlane.f32.xlu0 %v161
    %v163 = vpop.xlane.xlu0 %162
    %v164 = vsel %vm154, %v101, -inf
    %165 = vmax.xlane.f32.xlu0 %v164
    %v166 = vpop.xlane.xlu0 %165
    %v167 = vsel %vm154, %v102, -inf
    %168 = vmax.xlane.f32.xlu0 %v167
    %v169 = vpop.xlane.xlu0 %168
    %v170 = vsel %vm154, %v103, -inf
    %171 = vmax.xlane.f32.xlu0 %v170
    %v172 = vpop.xlane.xlu0 %171
    %v173 = vsel %vm154, %v104, -inf
    %174 = vmax.xlane.f32.xlu0 %v173
    %v175 = vpop.xlane.xlu0 %174
    %v176 = vsel %vm154, %v105, -inf
    %177 = vmax.xlane.f32.xlu0 %v176
    %v178 = vpop.xlane.xlu0 %177
    %v179 = vsub.f32 %v98, %v157
    %v180 = vsub.f32 %v99, %v160
    %v181 = vsub.f32 %v100, %v163
    %v182 = vsub.f32 %v101, %v166
    %v183 = vsub.f32 %v102, %v169
    %v184 = vsub.f32 %v103, %v172
    %v185 = vsub.f32 %v104, %v175
    %v186 = vsub.f32 %v105, %v178
    %v187 = vmul.f32 %v179, 1.442695
    %v188 = vpow.pop %v187
    %v189 = vmul.f32 %v180, 1.442695
    %v190 = vpow.pop %v189
    %v191 = vmul.f32 %v181, 1.442695
    %v192 = vpow.pop %v191
    %v193 = vmul.f32 %v182, 1.442695
    %v194 = vpow.pop %v193
    %v195 = vmul.f32 %v183, 1.442695
    %v196 = vpow.pop %v195
    %v197 = vmul.f32 %v184, 1.442695
    %v198 = vpow.pop %v197
    %v199 = vmul.f32 %v185, 1.442695
    %v200 = vpow.pop %v199
    %v201 = vmul.f32 %v186, 1.442695
    %v202 = vpow.pop %v201
    %v203 = vsel %vm154, %v188, 0.0
    %204 = vadd.xlane.f32.xlu0 %v203
    %v205 = vpop.xlane.xlu0 %204
    %v206 = vsel %vm154, %v190, 0.0
    %207 = vadd.xlane.f32.xlu0 %v206
    %v208 = vpop.xlane.xlu0 %207
    %v209 = vsel %vm154, %v192, 0.0
    %210 = vadd.xlane.f32.xlu0 %v209
    %v211 = vpop.xlane.xlu0 %210
    %v212 = vsel %vm154, %v194, 0.0
    %213 = vadd.xlane.f32.xlu0 %v212
    %v214 = vpop.xlane.xlu0 %213
    %v215 = vsel %vm154, %v196, 0.0
    %216 = vadd.xlane.f32.xlu0 %v215
    %v217 = vpop.xlane.xlu0 %216
    %v218 = vsel %vm154, %v198, 0.0
    %219 = vadd.xlane.f32.xlu0 %v218
    %v220 = vpop.xlane.xlu0 %219
    %v221 = vsel %vm154, %v200, 0.0
    %222 = vadd.xlane.f32.xlu0 %v221
    %v223 = vpop.xlane.xlu0 %222
    %v224 = vsel %vm154, %v202, 0.0
    %225 = vadd.xlane.f32.xlu0 %v224
    %v226 = vpop.xlane.xlu0 %225
    %v227 = vrcp.pop %v205
    %v228 = vrcp.pop %v208
    %v229 = vrcp.pop %v211
    %v230 = vrcp.pop %v214
    %v231 = vrcp.pop %v217
    %v232 = vrcp.pop %v220
    %v233 = vrcp.pop %v223
    %v234 = vrcp.pop %v226
    %v235 = vmul.f32 %v188, %v227
    %v236 = vmul.f32 %v190, %v228
    %v237 = vmul.f32 %v192, %v229
    %v238 = vmul.f32 %v194, %v230
    %v239 = vmul.f32 %v196, %v231
    %v240 = vmul.f32 %v198, %v232
    %v241 = vmul.f32 %v200, %v233
    %v242 = vmul.f32 %v202, %v234
    %v243 = vld [vmem:[#allocation2] sm:$0xff]
    %v244 = vmul.f32 %v146, %v235
    %v245 = vmul.f32 %v147, %v236
    %v246 = vmul.f32 %v148, %v237
    %v247 = vmul.f32 %v149, %v238
    %v248 = vmul.f32 %v150, %v239
    %v249 = vmul.f32 %v151, %v240
    %v250 = vmul.f32 %v152, %v241
    %v251 = vmul.f32 %v153, %v242
    %vm252 = vcmask 523264
    %v254 = vsel %vm252, 1.0, 0
    %256 = vmatprep.subr.mxu0 0.0
    %v257 = vand.u32 %v244, 4294901760
    %258 = vmatpush1.msra.mxu0 %v257
    %259 = vmatprep.subr.mxu0 0.0
    %v260 = vand.u32 %v245, 4294901760
    %261 = vmatpush1.msra.mxu0 %v260
    %262 = vmatprep.subr.mxu0 0.0
    %v263 = vand.u32 %v246, 4294901760
    %264 = vmatpush1.msra.mxu0 %v263
    %265 = vmatprep.subr.mxu0 0.0
    %v266 = vand.u32 %v247, 4294901760
    %267 = vmatpush1.msra.mxu0 %v266
    %268 = vmatprep.subr.mxu0 0.0
    %v269 = vand.u32 %v248, 4294901760
    %270 = vmatpush1.msra.mxu0 %v269
    %271 = vmatprep.subr.mxu0 0.0
    %v272 = vand.u32 %v249, 4294901760
    %273 = vmatpush1.msra.mxu0 %v272
    %274 = vmatprep.subr.mxu0 0.0
    %v275 = vand.u32 %v250, 4294901760
    %276 = vmatpush1.msra.mxu0 %v275
    %277 = vmatprep.subr.mxu0 0.0
    %v278 = vand.u32 %v251, 4294901760
    %279 = vmatpush1.msra.mxu0 %v278
    %280 = vmatprep.subr.mxu0 0.0
    %281 = vmatpush1.msra.mxu0 0.0
    %282 = vmatprep.subr.mxu0 0.0
    %283 = vmatpush1.msra.mxu0 0.0
    %284 = vmatprep.subr.mxu0 0.0
    %285 = vmatpush1.msra.mxu0 0.0
    %286 = vmatprep.subr.mxu0 0.0
    %287 = vmatpush1.msra.mxu0 0.0
    %288 = vmatprep.subr.mxu0 0.0
    %289 = vmatpush1.msra.mxu0 0.0
    %290 = vmatprep.subr.mxu0 0.0
    %291 = vmatpush1.msra.mxu0 0.0
    %292 = vmatprep.subr.mxu0 0.0
    %293 = vmatpush1.msra.mxu0 0.0
    %294 = vmatprep.subr.mxu0 0.0
    %295 = vmatpush1.msra.mxu0 0.0
    %296 = vmatprep.subr.mxu0 0.0
    %297 = vmatpush1.msra.mxu0 0.0
    %298 = vmatprep.subr.mxu0 0.0
    %299 = vmatpush1.msra.mxu0 0.0
    %300 = vmatprep.subr.mxu0 0.0
    %301 = vmatpush1.msra.mxu0 0.0
    %302 = vmatprep.subr.mxu0 0.0
    %303 = vmatpush1.msra.mxu0 0.0
    %304 = vmatprep.subr.mxu0 0.0
    %305 = vmatpush1.msra.mxu0 0.0
    %306 = vmatprep.subr.mxu0 0.0
    %307 = vmatpush1.msra.mxu0 0.0
    %308 = vmatprep.subr.mxu0 0.0
    %309 = vmatpush1.msra.mxu0 0.0
    %310 = vmatprep.subr.mxu0 0.0
    %311 = vmatpush1.msra.mxu0 0.0
    %312 = vmatprep.subr.mxu0 0.0
    %313 = vmatpush1.msra.mxu0 0.0
    %314 = vmatprep.subr.mxu0 0.0
    %315 = vmatpush1.msra.mxu0 0.0
    %316 = vmatprep.subr.mxu0 0.0
    %317 = vmatpush1.msra.mxu0 0.0
    %318 = vmatprep.subr.mxu0 0.0
    %319 = vmatpush1.msra.mxu0 0.0
    %320 = vmatprep.subr.mxu0 0.0
    %321 = vmatpush1.msra.mxu0 0.0
    %322 = vmatprep.subr.mxu0 0.0
    %323 = vmatpush1.msra.mxu0 0.0
    %324 = vmatprep.subr.mxu0 0.0
    %325 = vmatpush1.msra.mxu0 0.0
    %326 = vmatprep.subr.mxu0 0.0
    %327 = vmatpush1.msra.mxu0 0.0
    %328 = vmatprep.mubr.f32.mxu0 0.0
    %v329 = vand.u32 %v254, 4294901760
    %v330 = vsub.f32 %v254, %v329
    %v331 = vand.u32 %v330, 4294901760
    %v332 = vsub.f32 %v330, %v331
    %v333 = vand.u32 %v332, 4294901760
    %334 = vmatmul.mubr.f32.gmra.mrb[0].mxu0 %v333
    %v335 = vpop.f32.mrb[0].mxu0
    %v336 = vadd.f32 0.0, %v335
    %v337 = vpop.f32.mrb[0].mxu0
    %338 = vdwg.mxu0
    %339 = vmatprep.subr.mxu0 0.0
    %v340 = vand.u32 %v244, 4294901760
    %v341 = vsub.f32 %v244, %v340
    %v342 = vand.u32 %v341, 4294901760
    %v343 = vsub.f32 %v341, %v342
    %v344 = vand.u32 %v343, 4294901760
    %345 = vmatpush1.msra.mxu0 %v344
    %346 = vmatprep.subr.mxu0 0.0
    %v347 = vand.u32 %v245, 4294901760
    %v348 = vsub.f32 %v245, %v347
    %v349 = vand.u32 %v348, 4294901760
    %v350 = vsub.f32 %v348, %v349
    %v351 = vand.u32 %v350, 4294901760
    %352 = vmatpush1.msra.mxu0 %v351
    %353 = vmatprep.subr.mxu0 0.0
    %v354 = vand.u32 %v246, 4294901760
    %v355 = vsub.f32 %v246, %v354
    %v356 = vand.u32 %v355, 4294901760
    %v357 = vsub.f32 %v355, %v356
    %v358 = vand.u32 %v357, 4294901760
    %359 = vmatpush1.msra.mxu0 %v358
    %360 = vmatprep.subr.mxu0 0.0
    %v361 = vand.u32 %v247, 4294901760
    %v362 = vsub.f32 %v247, %v361
    %v363 = vand.u32 %v362, 4294901760
    %v364 = vsub.f32 %v362, %v363
    %v365 = vand.u32 %v364, 4294901760
    %366 = vmatpush1.msra.mxu0 %v365
    %367 = vmatprep.subr.mxu0 0.0
    %v368 = vand.u32 %v248, 4294901760
    %v369 = vsub.f32 %v248, %v368
    %v370 = vand.u32 %v369, 4294901760
    %v371 = vsub.f32 %v369, %v370
    %v372 = vand.u32 %v371, 4294901760
    %373 = vmatpush1.msra.mxu0 %v372
    %374 = vmatprep.subr.mxu0 0.0
    %v375 = vand.u32 %v249, 4294901760
    %v376 = vsub.f32 %v249, %v375
    %v377 = vand.u32 %v376, 4294901760
    %v378 = vsub.f32 %v376, %v377
    %v379 = vand.u32 %v378, 4294901760
    %380 = vmatpush1.msra.mxu0 %v379
    %381 = vmatprep.subr.mxu0 0.0
    %v382 = vand.u32 %v250, 4294901760
    %v383 = vsub.f32 %v250, %v382
    %v384 = vand.u32 %v383, 4294901760
    %v385 = vsub.f32 %v383, %v384
    %v386 = vand.u32 %v385, 4294901760
    %387 = vmatpush1.msra.mxu0 %v386
    %388 = vmatprep.subr.mxu0 0.0
    %v389 = vand.u32 %v251, 4294901760
    %v390 = vsub.f32 %v251, %v389
    %v391 = vand.u32 %v390, 4294901760
    %v392 = vsub.f32 %v390, %v391
    %v393 = vand.u32 %v392, 4294901760
    %394 = vmatpush1.msra.mxu0 %v393
    %395 = vmatprep.subr.mxu0 0.0
    %396 = vmatpush1.msra.mxu0 0.0
    %397 = vmatprep.subr.mxu0 0.0
    %398 = vmatpush1.msra.mxu0 0.0
    %399 = vmatprep.subr.mxu0 0.0
    %400 = vmatpush1.msra.mxu0 0.0
    %401 = vmatprep.subr.mxu0 0.0
    %402 = vmatpush1.msra.mxu0 0.0
    %403 = vmatprep.subr.mxu0 0.0
    %404 = vmatpush1.msra.mxu0 0.0
    %405 = vmatprep.subr.mxu0 0.0
    %406 = vmatpush1.msra.mxu0 0.0
    %407 = vmatprep.subr.mxu0 0.0
    %408 = vmatpush1.msra.mxu0 0.0
    %409 = vmatprep.subr.mxu0 0.0
    %410 = vmatpush1.msra.mxu0 0.0
    %411 = vmatprep.subr.mxu0 0.0
    %412 = vmatpush1.msra.mxu0 0.0
    %413 = vmatprep.subr.mxu0 0.0
    %414 = vmatpush1.msra.mxu0 0.0
    %415 = vmatprep.subr.mxu0 0.0
    %416 = vmatpush1.msra.mxu0 0.0
    %417 = vmatprep.subr.mxu0 0.0
    %418 = vmatpush1.msra.mxu0 0.0
    %419 = vmatprep.subr.mxu0 0.0
    %420 = vmatpush1.msra.mxu0 0.0
    %421 = vmatprep.subr.mxu0 0.0
    %422 = vmatpush1.msra.mxu0 0.0
    %423 = vmatprep.subr.mxu0 0.0
    %424 = vmatpush1.msra.mxu0 0.0
    %425 = vmatprep.subr.mxu0 0.0
    %426 = vmatpush1.msra.mxu0 0.0
    %427 = vmatprep.subr.mxu0 0.0
    %428 = vmatpush1.msra.mxu0 0.0
    %429 = vmatprep.subr.mxu0 0.0
    %430 = vmatpush1.msra.mxu0 0.0
    %431 = vmatprep.subr.mxu0 0.0
    %432 = vmatpush1.msra.mxu0 0.0
    %433 = vmatprep.subr.mxu0 0.0
    %434 = vmatpush1.msra.mxu0 0.0
    %435 = vmatprep.subr.mxu0 0.0
    %436 = vmatpush1.msra.mxu0 0.0
    %437 = vmatprep.subr.mxu0 0.0
    %438 = vmatpush1.msra.mxu0 0.0
    %439 = vmatprep.subr.mxu0 0.0
    %440 = vmatpush1.msra.mxu0 0.0
    %441 = vmatprep.subr.mxu0 0.0
    %442 = vmatpush1.msra.mxu0 0.0
    %443 = vmatprep.mubr.f32.mxu0 0.0
    %v444 = vand.u32 %v254, 4294901760
    %445 = vmatmul.mubr.f32.gmra.mrb[0].mxu0 %v444
    %v446 = vpop.f32.mrb[0].mxu0
    %v447 = vadd.f32 %v336, %v446
    %v448 = vpop.f32.mrb[0].mxu0
    %449 = vdwg.mxu0
    %450 = vmatprep.subr.mxu0 0.0
    %v451 = vand.u32 %v244, 4294901760
    %v452 = vsub.f32 %v244, %v451
    %453 = vmatpush1.msra.mxu0 %v452
    %454 = vmatprep.subr.mxu0 0.0
    %v455 = vand.u32 %v245, 4294901760
    %v456 = vsub.f32 %v245, %v455
    %457 = vmatpush1.msra.mxu0 %v456
    %458 = vmatprep.subr.mxu0 0.0
    %v459 = vand.u32 %v246, 4294901760
    %v460 = vsub.f32 %v246, %v459
    %461 = vmatpush1.msra.mxu0 %v460
    %462 = vmatprep.subr.mxu0 0.0
    %v463 = vand.u32 %v247, 4294901760
    %v464 = vsub.f32 %v247, %v463
    %465 = vmatpush1.msra.mxu0 %v464
    %466 = vmatprep.subr.mxu0 0.0
    %v467 = vand.u32 %v248, 4294901760
    %v468 = vsub.f32 %v248, %v467
    %469 = vmatpush1.msra.mxu0 %v468
    %470 = vmatprep.subr.mxu0 0.0
    %v471 = vand.u32 %v249, 4294901760
    %v472 = vsub.f32 %v249, %v471
    %473 = vmatpush1.msra.mxu0 %v472
    %474 = vmatprep.subr.mxu0 0.0
    %v475 = vand.u32 %v250, 4294901760
    %v476 = vsub.f32 %v250, %v475
    %477 = vmatpush1.msra.mxu0 %v476
    %478 = vmatprep.subr.mxu0 0.0
    %v479 = vand.u32 %v251, 4294901760
    %v480 = vsub.f32 %v251, %v479
    %481 = vmatpush1.msra.mxu0 %v480
    %482 = vmatprep.subr.mxu0 0.0
    %483 = vmatpush1.msra.mxu0 0.0
    %484 = vmatprep.subr.mxu0 0.0
    %485 = vmatpush1.msra.mxu0 0.0
    %486 = vmatprep.subr.mxu0 0.0
    %487 = vmatpush1.msra.mxu0 0.0
    %488 = vmatprep.subr.mxu0 0.0
    %489 = vmatpush1.msra.mxu0 0.0
    %490 = vmatprep.subr.mxu0 0.0
    %491 = vmatpush1.msra.mxu0 0.0
    %492 = vmatprep.subr.mxu0 0.0
    %493 = vmatpush1.msra.mxu0 0.0
    %494 = vmatprep.subr.mxu0 0.0
    %495 = vmatpush1.msra.mxu0 0.0
    %496 = vmatprep.subr.mxu0 0.0
    %497 = vmatpush1.msra.mxu0 0.0
    %498 = vmatprep.subr.mxu0 0.0
    %499 = vmatpush1.msra.mxu0 0.0
    %500 = vmatprep.subr.mxu0 0.0
    %501 = vmatpush1.msra.mxu0 0.0
    %502 = vmatprep.subr.mxu0 0.0
    %503 = vmatpush1.msra.mxu0 0.0
    %504 = vmatprep.subr.mxu0 0.0
    %505 = vmatpush1.msra.mxu0 0.0
    %506 = vmatprep.subr.mxu0 0.0
    %507 = vmatpush1.msra.mxu0 0.0
    %508 = vmatprep.subr.mxu0 0.0
    %509 = vmatpush1.msra.mxu0 0.0
    %510 = vmatprep.subr.mxu0 0.0
    %511 = vmatpush1.msra.mxu0 0.0
    %512 = vmatprep.subr.mxu0 0.0
    %513 = vmatpush1.msra.mxu0 0.0
    %514 = vmatprep.subr.mxu0 0.0
    %515 = vmatpush1.msra.mxu0 0.0
    %516 = vmatprep.subr.mxu0 0.0
    %517 = vmatpush1.msra.mxu0 0.0
    %518 = vmatprep.subr.mxu0 0.0
    %519 = vmatpush1.msra.mxu0 0.0
    %520 = vmatprep.subr.mxu0 0.0
    %521 = vmatpush1.msra.mxu0 0.0
    %522 = vmatprep.subr.mxu0 0.0
    %523 = vmatpush1.msra.mxu0 0.0
    %524 = vmatprep.subr.mxu0 0.0
    %525 = vmatpush1.msra.mxu0 0.0
    %526 = vmatprep.subr.mxu0 0.0
    %527 = vmatpush1.msra.mxu0 0.0
    %528 = vmatprep.subr.mxu0 0.0
    %529 = vmatpush1.msra.mxu0 0.0
    %530 = vmatprep.mubr.f32.mxu0 0.0
    %v531 = vand.u32 %v254, 4294901760
    %v532 = vsub.f32 %v254, %v531
    %533 = vmatmul.mubr.f32.gmra.mrb[0].mxu0 %v532
    %v534 = vpop.f32.mrb[0].mxu0
    %v535 = vadd.f32 %v447, %v534
    %v536 = vpop.f32.mrb[0].mxu0
    %537 = vdwg.mxu0
    %538 = vmatprep.subr.mxu0 0.0
    %v539 = vand.u32 %v244, 4294901760
    %540 = vmatpush1.msra.mxu0 %v539
    %541 = vmatprep.subr.mxu0 0.0
    %v542 = vand.u32 %v245, 4294901760
    %543 = vmatpush1.msra.mxu0 %v542
    %544 = vmatprep.subr.mxu0 0.0
    %v545 = vand.u32 %v246, 4294901760
    %546 = vmatpush1.msra.mxu0 %v545
    %547 = vmatprep.subr.mxu0 0.0
    %v548 = vand.u32 %v247, 4294901760
    %549 = vmatpush1.msra.mxu0 %v548
    %550 = vmatprep.subr.mxu0 0.0
    %v551 = vand.u32 %v248, 4294901760
    %552 = vmatpush1.msra.mxu0 %v551
    %553 = vmatprep.subr.mxu0 0.0
    %v554 = vand.u32 %v249, 4294901760
    %555 = vmatpush1.msra.mxu0 %v554
    %556 = vmatprep.subr.mxu0 0.0
    %v557 = vand.u32 %v250, 4294901760
    %558 = vmatpush1.msra.mxu0 %v557
    %559 = vmatprep.subr.mxu0 0.0
    %v560 = vand.u32 %v251, 4294901760
    %561 = vmatpush1.msra.mxu0 %v560
    %562 = vmatprep.subr.mxu0 0.0
    %563 = vmatpush1.msra.mxu0 0.0
    %564 = vmatprep.subr.mxu0 0.0
    %565 = vmatpush1.msra.mxu0 0.0
    %566 = vmatprep.subr.mxu0 0.0
    %567 = vmatpush1.msra.mxu0 0.0
    %568 = vmatprep.subr.mxu0 0.0
    %569 = vmatpush1.msra.mxu0 0.0
    %570 = vmatprep.subr.mxu0 0.0
    %571 = vmatpush1.msra.mxu0 0.0
    %572 = vmatprep.subr.mxu0 0.0
    %573 = vmatpush1.msra.mxu0 0.0
    %574 = vmatprep.subr.mxu0 0.0
    %575 = vmatpush1.msra.mxu0 0.0
    %576 = vmatprep.subr.mxu0 0.0
    %577 = vmatpush1.msra.mxu0 0.0
    %578 = vmatprep.subr.mxu0 0.0
    %579 = vmatpush1.msra.mxu0 0.0
    %580 = vmatprep.subr.mxu0 0.0
    %581 = vmatpush1.msra.mxu0 0.0
    %582 = vmatprep.subr.mxu0 0.0
    %583 = vmatpush1.msra.mxu0 0.0
    %584 = vmatprep.subr.mxu0 0.0
    %585 = vmatpush1.msra.mxu0 0.0
    %586 = vmatprep.subr.mxu0 0.0
    %587 = vmatpush1.msra.mxu0 0.0
    %588 = vmatprep.subr.mxu0 0.0
    %589 = vmatpush1.msra.mxu0 0.0
    %590 = vmatprep.subr.mxu0 0.0
    %591 = vmatpush1.msra.mxu0 0.0
    %592 = vmatprep.subr.mxu0 0.0
    %593 = vmatpush1.msra.mxu0 0.0
    %594 = vmatprep.subr.mxu0 0.0
    %595 = vmatpush1.msra.mxu0 0.0
    %596 = vmatprep.subr.mxu0 0.0
    %597 = vmatpush1.msra.mxu0 0.0
    %598 = vmatprep.subr.mxu0 0.0
    %599 = vmatpush1.msra.mxu0 0.0
    %600 = vmatprep.subr.mxu0 0.0
    %601 = vmatpush1.msra.mxu0 0.0
    %602 = vmatprep.subr.mxu0 0.0
    %603 = vmatpush1.msra.mxu0 0.0
    %604 = vmatprep.subr.mxu0 0.0
    %605 = vmatpush1.msra.mxu0 0.0
    %606 = vmatprep.subr.mxu0 0.0
    %607 = vmatpush1.msra.mxu0 0.0
    %608 = vmatprep.subr.mxu0 0.0
    %609 = vmatpush1.msra.mxu0 0.0
    %610 = vmatprep.mubr.f32.mxu0 0.0
    %v611 = vand.u32 %v254, 4294901760
    %v612 = vsub.f32 %v254, %v611
    %v613 = vand.u32 %v612, 4294901760
    %614 = vmatmul.mubr.f32.gmra.mrb[0].mxu0 %v613
    %v615 = vpop.f32.mrb[0].mxu0
    %v616 = vadd.f32 %v535, %v615
    %v617 = vpop.f32.mrb[0].mxu0
    %618 = vdwg.mxu0
    %619 = vmatprep.subr.mxu0 0.0
    %v620 = vand.u32 %v244, 4294901760
    %v621 = vsub.f32 %v244, %v620
    %v622 = vand.u32 %v621, 4294901760
    %623 = vmatpush1.msra.mxu0 %v622
    %624 = vmatprep.subr.mxu0 0.0
    %v625 = vand.u32 %v245, 4294901760
    %v626 = vsub.f32 %v245, %v625
    %v627 = vand.u32 %v626, 4294901760
    %628 = vmatpush1.msra.mxu0 %v627
    %629 = vmatprep.subr.mxu0 0.0
    %v630 = vand.u32 %v246, 4294901760
    %v631 = vsub.f32 %v246, %v630
    %v632 = vand.u32 %v631, 4294901760
    %633 = vmatpush1.msra.mxu0 %v632
    %634 = vmatprep.subr.mxu0 0.0
    %v635 = vand.u32 %v247, 4294901760
    %v636 = vsub.f32 %v247, %v635
    %v637 = vand.u32 %v636, 4294901760
    %638 = vmatpush1.msra.mxu0 %v637
    %639 = vmatprep.subr.mxu0 0.0
    %v640 = vand.u32 %v248, 4294901760
    %v641 = vsub.f32 %v248, %v640
    %v642 = vand.u32 %v641, 4294901760
    %643 = vmatpush1.msra.mxu0 %v642
    %644 = vmatprep.subr.mxu0 0.0
    %v645 = vand.u32 %v249, 4294901760
    %v646 = vsub.f32 %v249, %v645
    %v647 = vand.u32 %v646, 4294901760
    %648 = vmatpush1.msra.mxu0 %v647
    %649 = vmatprep.subr.mxu0 0.0
    %v650 = vand.u32 %v250, 4294901760
    %v651 = vsub.f32 %v250, %v650
    %v652 = vand.u32 %v651, 4294901760
    %653 = vmatpush1.msra.mxu0 %v652
    %654 = vmatprep.subr.mxu0 0.0
    %v655 = vand.u32 %v251, 4294901760
    %v656 = vsub.f32 %v251, %v655
    %v657 = vand.u32 %v656, 4294901760
    %658 = vmatpush1.msra.mxu0 %v657
    %659 = vmatprep.subr.mxu0 0.0
    %660 = vmatpush1.msra.mxu0 0.0
    %661 = vmatprep.subr.mxu0 0.0
    %662 = vmatpush1.msra.mxu0 0.0
    %663 = vmatprep.subr.mxu0 0.0
    %664 = vmatpush1.msra.mxu0 0.0
    %665 = vmatprep.subr.mxu0 0.0
    %666 = vmatpush1.msra.mxu0 0.0
    %667 = vmatprep.subr.mxu0 0.0
    %668 = vmatpush1.msra.mxu0 0.0
    %669 = vmatprep.subr.mxu0 0.0
    %670 = vmatpush1.msra.mxu0 0.0
    %671 = vmatprep.subr.mxu0 0.0
    %672 = vmatpush1.msra.mxu0 0.0
    %673 = vmatprep.subr.mxu0 0.0
    %674 = vmatpush1.msra.mxu0 0.0
    %675 = vmatprep.subr.mxu0 0.0
    %676 = vmatpush1.msra.mxu0 0.0
    %677 = vmatprep.subr.mxu0 0.0
    %678 = vmatpush1.msra.mxu0 0.0
    %679 = vmatprep.subr.mxu0 0.0
    %680 = vmatpush1.msra.mxu0 0.0
    %681 = vmatprep.subr.mxu0 0.0
    %682 = vmatpush1.msra.mxu0 0.0
    %683 = vmatprep.subr.mxu0 0.0
    %684 = vmatpush1.msra.mxu0 0.0
    %685 = vmatprep.subr.mxu0 0.0
    %686 = vmatpush1.msra.mxu0 0.0
    %687 = vmatprep.subr.mxu0 0.0
    %688 = vmatpush1.msra.mxu0 0.0
    %689 = vmatprep.subr.mxu0 0.0
    %690 = vmatpush1.msra.mxu0 0.0
    %691 = vmatprep.subr.mxu0 0.0
    %692 = vmatpush1.msra.mxu0 0.0
    %693 = vmatprep.subr.mxu0 0.0
    %694 = vmatpush1.msra.mxu0 0.0
    %695 = vmatprep.subr.mxu0 0.0
    %696 = vmatpush1.msra.mxu0 0.0
    %697 = vmatprep.subr.mxu0 0.0
    %698 = vmatpush1.msra.mxu0 0.0
    %699 = vmatprep.subr.mxu0 0.0
    %700 = vmatpush1.msra.mxu0 0.0
    %701 = vmatprep.subr.mxu0 0.0
    %702 = vmatpush1.msra.mxu0 0.0
    %703 = vmatprep.subr.mxu0 0.0
    %704 = vmatpush1.msra.mxu0 0.0
    %705 = vmatprep.subr.mxu0 0.0
    %706 = vmatpush1.msra.mxu0 0.0
    %707 = vmatprep.mubr.f32.mxu0 0.0
    %v708 = vand.u32 %v254, 4294901760
    %709 = vmatmul.mubr.f32.gmra.mrb[0].mxu0 %v708
    %v710 = vpop.f32.mrb[0].mxu0
    %v711 = vadd.f32 %v616, %v710
    %v712 = vpop.f32.mrb[0].mxu0
    %713 = vdwg.mxu0
    %714 = vmatprep.subr.mxu0 0.0
    %v715 = vand.u32 %v244, 4294901760
    %716 = vmatpush1.msra.mxu0 %v715
    %717 = vmatprep.subr.mxu0 0.0
    %v718 = vand.u32 %v245, 4294901760
    %719 = vmatpush1.msra.mxu0 %v718
    %720 = vmatprep.subr.mxu0 0.0
    %v721 = vand.u32 %v246, 4294901760
    %722 = vmatpush1.msra.mxu0 %v721
    %723 = vmatprep.subr.mxu0 0.0
    %v724 = vand.u32 %v247, 4294901760
    %725 = vmatpush1.msra.mxu0 %v724
    %726 = vmatprep.subr.mxu0 0.0
    %v727 = vand.u32 %v248, 4294901760
    %728 = vmatpush1.msra.mxu0 %v727
    %729 = vmatprep.subr.mxu0 0.0
    %v730 = vand.u32 %v249, 4294901760
    %731 = vmatpush1.msra.mxu0 %v730
    %732 = vmatprep.subr.mxu0 0.0
    %v733 = vand.u32 %v250, 4294901760
    %734 = vmatpush1.msra.mxu0 %v733
    %735 = vmatprep.subr.mxu0 0.0
    %v736 = vand.u32 %v251, 4294901760
    %737 = vmatpush1.msra.mxu0 %v736
    %738 = vmatprep.subr.mxu0 0.0
    %739 = vmatpush1.msra.mxu0 0.0
    %740 = vmatprep.subr.mxu0 0.0
    %741 = vmatpush1.msra.mxu0 0.0
    %742 = vmatprep.subr.mxu0 0.0
    %743 = vmatpush1.msra.mxu0 0.0
    %744 = vmatprep.subr.mxu0 0.0
    %745 = vmatpush1.msra.mxu0 0.0
    %746 = vmatprep.subr.mxu0 0.0
    %747 = vmatpush1.msra.mxu0 0.0
    %748 = vmatprep.subr.mxu0 0.0
    %749 = vmatpush1.msra.mxu0 0.0
    %750 = vmatprep.subr.mxu0 0.0
    %751 = vmatpush1.msra.mxu0 0.0
    %752 = vmatprep.subr.mxu0 0.0
    %753 = vmatpush1.msra.mxu0 0.0
    %754 = vmatprep.subr.mxu0 0.0
    %755 = vmatpush1.msra.mxu0 0.0
    %756 = vmatprep.subr.mxu0 0.0
    %757 = vmatpush1.msra.mxu0 0.0
    %758 = vmatprep.subr.mxu0 0.0
    %759 = vmatpush1.msra.mxu0 0.0
    %760 = vmatprep.subr.mxu0 0.0
    %761 = vmatpush1.msra.mxu0 0.0
    %762 = vmatprep.subr.mxu0 0.0
    %763 = vmatpush1.msra.mxu0 0.0
    %764 = vmatprep.subr.mxu0 0.0
    %765 = vmatpush1.msra.mxu0 0.0
    %766 = vmatprep.subr.mxu0 0.0
    %767 = vmatpush1.msra.mxu0 0.0
    %768 = vmatprep.subr.mxu0 0.0
    %769 = vmatpush1.msra.mxu0 0.0
    %770 = vmatprep.subr.mxu0 0.0
    %771 = vmatpush1.msra.mxu0 0.0
    %772 = vmatprep.subr.mxu0 0.0
    %773 = vmatpush1.msra.mxu0 0.0
    %774 = vmatprep.subr.mxu0 0.0
    %775 = vmatpush1.msra.mxu0 0.0
    %776 = vmatprep.subr.mxu0 0.0
    %777 = vmatpush1.msra.mxu0 0.0
    %778 = vmatprep.subr.mxu0 0.0
    %779 = vmatpush1.msra.mxu0 0.0
    %780 = vmatprep.subr.mxu0 0.0
    %781 = vmatpush1.msra.mxu0 0.0
    %782 = vmatprep.subr.mxu0 0.0
    %783 = vmatpush1.msra.mxu0 0.0
    %784 = vmatprep.subr.mxu0 0.0
    %785 = vmatpush1.msra.mxu0 0.0
    %786 = vmatprep.mubr.f32.mxu0 0.0
    %v787 = vand.u32 %v254, 4294901760
    %788 = vmatmul.mubr.f32.gmra.mrb[0].mxu0 %v787
    %v789 = vpop.f32.mrb[0].mxu0
    %v790 = vadd.f32 %v711, %v789
    %v791 = vpop.f32.mrb[0].mxu0
    %792 = vdwg.mxu0
    %v793 = vadd.f32 %v243, %v790
    %794 = vst.msk [vmem:[#allocation2] sm:$0xff] %vm154, %v793
    %v795 = vld [vmem:[#allocation4] sm:$0xff]
    %796 = vmatprep.subr.mxu0 0.0
    %v797 = vand.u32 %v235, 4294901760
    %798 = vmatpush1.msra.mxu0 %v797
    %799 = vmatprep.subr.mxu0 0.0
    %v800 = vand.u32 %v236, 4294901760
    %801 = vmatpush1.msra.mxu0 %v800
    %802 = vmatprep.subr.mxu0 0.0
    %v803 = vand.u32 %v237, 4294901760
    %804 = vmatpush1.msra.mxu0 %v803
    %805 = vmatprep.subr.mxu0 0.0
    %v806 = vand.u32 %v238, 4294901760
    %807 = vmatpush1.msra.mxu0 %v806
    %808 = vmatprep.subr.mxu0 0.0
    %v809 = vand.u32 %v239, 4294901760
    %810 = vmatpush1.msra.mxu0 %v809
    %811 = vmatprep.subr.mxu0 0.0
    %v812 = vand.u32 %v240, 4294901760
    %813 = vmatpush1.msra.mxu0 %v812
    %814 = vmatprep.subr.mxu0 0.0
    %v815 = vand.u32 %v241, 4294901760
    %816 = vmatpush1.msra.mxu0 %v815
    %817 = vmatprep.subr.mxu0 0.0
    %v818 = vand.u32 %v242, 4294901760
    %819 = vmatpush1.msra.mxu0 %v818
    %820 = vmatprep.subr.mxu0 0.0
    %821 = vmatpush1.msra.mxu0 0.0
    %822 = vmatprep.subr.mxu0 0.0
    %823 = vmatpush1.msra.mxu0 0.0
    %824 = vmatprep.subr.mxu0 0.0
    %825 = vmatpush1.msra.mxu0 0.0
    %826 = vmatprep.subr.mxu0 0.0
    %827 = vmatpush1.msra.mxu0 0.0
    %828 = vmatprep.subr.mxu0 0.0
    %829 = vmatpush1.msra.mxu0 0.0
    %830 = vmatprep.subr.mxu0 0.0
    %831 = vmatpush1.msra.mxu0 0.0
    %832 = vmatprep.subr.mxu0 0.0
    %833 = vmatpush1.msra.mxu0 0.0
    %834 = vmatprep.subr.mxu0 0.0
    %835 = vmatpush1.msra.mxu0 0.0
    %836 = vmatprep.subr.mxu0 0.0
    %837 = vmatpush1.msra.mxu0 0.0
    %838 = vmatprep.subr.mxu0 0.0
    %839 = vmatpush1.msra.mxu0 0.0
    %840 = vmatprep.subr.mxu0 0.0
    %841 = vmatpush1.msra.mxu0 0.0
    %842 = vmatprep.subr.mxu0 0.0
    %843 = vmatpush1.msra.mxu0 0.0
    %844 = vmatprep.subr.mxu0 0.0
    %845 = vmatpush1.msra.mxu0 0.0
    %846 = vmatprep.subr.mxu0 0.0
    %847 = vmatpush1.msra.mxu0 0.0
    %848 = vmatprep.subr.mxu0 0.0
    %849 = vmatpush1.msra.mxu0 0.0
    %850 = vmatprep.subr.mxu0 0.0
    %851 = vmatpush1.msra.mxu0 0.0
    %852 = vmatprep.subr.mxu0 0.0
    %853 = vmatpush1.msra.mxu0 0.0
    %854 = vmatprep.subr.mxu0 0.0
    %855 = vmatpush1.msra.mxu0 0.0
    %856 = vmatprep.subr.mxu0 0.0
    %857 = vmatpush1.msra.mxu0 0.0
    %858 = vmatprep.subr.mxu0 0.0
    %859 = vmatpush1.msra.mxu0 0.0
    %860 = vmatprep.subr.mxu0 0.0
    %861 = vmatpush1.msra.mxu0 0.0
    %862 = vmatprep.subr.mxu0 0.0
    %863 = vmatpush1.msra.mxu0 0.0
    %864 = vmatprep.subr.mxu0 0.0
    %865 = vmatpush1.msra.mxu0 0.0
    %866 = vmatprep.subr.mxu0 0.0
    %867 = vmatpush1.msra.mxu0 0.0
    %868 = vmatprep.mubr.f32.mxu0 0.0
    %v869 = vand.u32 %v254, 4294901760
    %v870 = vsub.f32 %v254, %v869
    %v871 = vand.u32 %v870, 4294901760
    %v872 = vsub.f32 %v870, %v871
    %v873 = vand.u32 %v872, 4294901760
    %874 = vmatmul.mubr.f32.gmra.mrb[0].mxu0 %v873
    %v875 = vpop.f32.mrb[0].mxu0
    %v876 = vadd.f32 0.0, %v875
    %v877 = vpop.f32.mrb[0].mxu0
    %878 = vdwg.mxu0
    %879 = vmatprep.subr.mxu0 0.0
    %v880 = vand.u32 %v235, 4294901760
    %v881 = vsub.f32 %v235, %v880
    %v882 = vand.u32 %v881, 4294901760
    %v883 = vsub.f32 %v881, %v882
    %v884 = vand.u32 %v883, 4294901760
    %885 = vmatpush1.msra.mxu0 %v884
    %886 = vmatprep.subr.mxu0 0.0
    %v887 = vand.u32 %v236, 4294901760
    %v888 = vsub.f32 %v236, %v887
    %v889 = vand.u32 %v888, 4294901760
    %v890 = vsub.f32 %v888, %v889
    %v891 = vand.u32 %v890, 4294901760
    %892 = vmatpush1.msra.mxu0 %v891
    %893 = vmatprep.subr.mxu0 0.0
    %v894 = vand.u32 %v237, 4294901760
    %v895 = vsub.f32 %v237, %v894
    %v896 = vand.u32 %v895, 4294901760
    %v897 = vsub.f32 %v895, %v896
    %v898 = vand.u32 %v897, 4294901760
    %899 = vmatpush1.msra.mxu0 %v898
    %900 = vmatprep.subr.mxu0 0.0
    %v901 = vand.u32 %v238, 4294901760
    %v902 = vsub.f32 %v238, %v901
    %v903 = vand.u32 %v902, 4294901760
    %v904 = vsub.f32 %v902, %v903
    %v905 = vand.u32 %v904, 4294901760
    %906 = vmatpush1.msra.mxu0 %v905
    %907 = vmatprep.subr.mxu0 0.0
    %v908 = vand.u32 %v239, 4294901760
    %v909 = vsub.f32 %v239, %v908
    %v910 = vand.u32 %v909, 4294901760
    %v911 = vsub.f32 %v909, %v910
    %v912 = vand.u32 %v911, 4294901760
    %913 = vmatpush1.msra.mxu0 %v912
    %914 = vmatprep.subr.mxu0 0.0
    %v915 = vand.u32 %v240, 4294901760
    %v916 = vsub.f32 %v240, %v915
    %v917 = vand.u32 %v916, 4294901760
    %v918 = vsub.f32 %v916, %v917
    %v919 = vand.u32 %v918, 4294901760
    %920 = vmatpush1.msra.mxu0 %v919
    %921 = vmatprep.subr.mxu0 0.0
    %v922 = vand.u32 %v241, 4294901760
    %v923 = vsub.f32 %v241, %v922
    %v924 = vand.u32 %v923, 4294901760
    %v925 = vsub.f32 %v923, %v924
    %v926 = vand.u32 %v925, 4294901760
    %927 = vmatpush1.msra.mxu0 %v926
    %928 = vmatprep.subr.mxu0 0.0
    %v929 = vand.u32 %v242, 4294901760
    %v930 = vsub.f32 %v242, %v929
    %v931 = vand.u32 %v930, 4294901760
    %v932 = vsub.f32 %v930, %v931
    %v933 = vand.u32 %v932, 4294901760
    %934 = vmatpush1.msra.mxu0 %v933
    %935 = vmatprep.subr.mxu0 0.0
    %936 = vmatpush1.msra.mxu0 0.0
    %937 = vmatprep.subr.mxu0 0.0
    %938 = vmatpush1.msra.mxu0 0.0
    %939 = vmatprep.subr.mxu0 0.0
    %940 = vmatpush1.msra.mxu0 0.0
    %941 = vmatprep.subr.mxu0 0.0
    %942 = vmatpush1.msra.mxu0 0.0
    %943 = vmatprep.subr.mxu0 0.0
    %944 = vmatpush1.msra.mxu0 0.0
    %945 = vmatprep.subr.mxu0 0.0
    %946 = vmatpush1.msra.mxu0 0.0
    %947 = vmatprep.subr.mxu0 0.0
    %948 = vmatpush1.msra.mxu0 0.0
    %949 = vmatprep.subr.mxu0 0.0
    %950 = vmatpush1.msra.mxu0 0.0
    %951 = vmatprep.subr.mxu0 0.0
    %952 = vmatpush1.msra.mxu0 0.0
    %953 = vmatprep.subr.mxu0 0.0
    %954 = vmatpush1.msra.mxu0 0.0
    %955 = vmatprep.subr.mxu0 0.0
    %956 = vmatpush1.msra.mxu0 0.0
    %957 = vmatprep.subr.mxu0 0.0
    %958 = vmatpush1.msra.mxu0 0.0
    %959 = vmatprep.subr.mxu0 0.0
    %960 = vmatpush1.msra.mxu0 0.0
    %961 = vmatprep.subr.mxu0 0.0
    %962 = vmatpush1.msra.mxu0 0.0
    %963 = vmatprep.subr.mxu0 0.0
    %964 = vmatpush1.msra.mxu0 0.0
    %965 = vmatprep.subr.mxu0 0.0
    %966 = vmatpush1.msra.mxu0 0.0
    %967 = vmatprep.subr.mxu0 0.0
    %968 = vmatpush1.msra.mxu0 0.0
    %969 = vmatprep.subr.mxu0 0.0
    %970 = vmatpush1.msra.mxu0 0.0
    %971 = vmatprep.subr.mxu0 0.0
    %972 = vmatpush1.msra.mxu0 0.0
    %973 = vmatprep.subr.mxu0 0.0
    %974 = vmatpush1.msra.mxu0 0.0
    %975 = vmatprep.subr.mxu0 0.0
    %976 = vmatpush1.msra.mxu0 0.0
    %977 = vmatprep.subr.mxu0 0.0
    %978 = vmatpush1.msra.mxu0 0.0
    %979 = vmatprep.subr.mxu0 0.0
    %980 = vmatpush1.msra.mxu0 0.0
    %981 = vmatprep.subr.mxu0 0.0
    %982 = vmatpush1.msra.mxu0 0.0
    %983 = vmatprep.mubr.f32.mxu0 0.0
    %v984 = vand.u32 %v254, 4294901760
    %985 = vmatmul.mubr.f32.gmra.mrb[0].mxu0 %v984
    %v986 = vpop.f32.mrb[0].mxu0
    %v987 = vadd.f32 %v876, %v986
    %v988 = vpop.f32.mrb[0].mxu0
    %989 = vdwg.mxu0
    %990 = vmatprep.subr.mxu0 0.0
    %v991 = vand.u32 %v235, 4294901760
    %v992 = vsub.f32 %v235, %v991
    %993 = vmatpush1.msra.mxu0 %v992
    %994 = vmatprep.subr.mxu0 0.0
    %v995 = vand.u32 %v236, 4294901760
    %v996 = vsub.f32 %v236, %v995
    %997 = vmatpush1.msra.mxu0 %v996
    %998 = vmatprep.subr.mxu0 0.0
    %v999 = vand.u32 %v237, 4294901760
    %v1000 = vsub.f32 %v237, %v999
    %1001 = vmatpush1.msra.mxu0 %v1000
    %1002 = vmatprep.subr.mxu0 0.0
    %v1003 = vand.u32 %v238, 4294901760
    %v1004 = vsub.f32 %v238, %v1003
    %1005 = vmatpush1.msra.mxu0 %v1004
    %1006 = vmatprep.subr.mxu0 0.0
    %v1007 = vand.u32 %v239, 4294901760
    %v1008 = vsub.f32 %v239, %v1007
    %1009 = vmatpush1.msra.mxu0 %v1008
    %1010 = vmatprep.subr.mxu0 0.0
    %v1011 = vand.u32 %v240, 4294901760
    %v1012 = vsub.f32 %v240, %v1011
    %1013 = vmatpush1.msra.mxu0 %v1012
    %1014 = vmatprep.subr.mxu0 0.0
    %v1015 = vand.u32 %v241, 4294901760
    %v1016 = vsub.f32 %v241, %v1015
    %1017 = vmatpush1.msra.mxu0 %v1016
    %1018 = vmatprep.subr.mxu0 0.0
    %v1019 = vand.u32 %v242, 4294901760
    %v1020 = vsub.f32 %v242, %v1019
    %1021 = vmatpush1.msra.mxu0 %v1020
    %1022 = vmatprep.subr.mxu0 0.0
    %1023 = vmatpush1.msra.mxu0 0.0
    %1024 = vmatprep.subr.mxu0 0.0
    %1025 = vmatpush1.msra.mxu0 0.0
    %1026 = vmatprep.subr.mxu0 0.0
    %1027 = vmatpush1.msra.mxu0 0.0
    %1028 = vmatprep.subr.mxu0 0.0
    %1029 = vmatpush1.msra.mxu0 0.0
    %1030 = vmatprep.subr.mxu0 0.0
    %1031 = vmatpush1.msra.mxu0 0.0
    %1032 = vmatprep.subr.mxu0 0.0
    %1033 = vmatpush1.msra.mxu0 0.0
    %1034 = vmatprep.subr.mxu0 0.0
    %1035 = vmatpush1.msra.mxu0 0.0
    %1036 = vmatprep.subr.mxu0 0.0
    %1037 = vmatpush1.msra.mxu0 0.0
    %1038 = vmatprep.subr.mxu0 0.0
    %1039 = vmatpush1.msra.mxu0 0.0
    %1040 = vmatprep.subr.mxu0 0.0
    %1041 = vmatpush1.msra.mxu0 0.0
    %1042 = vmatprep.subr.mxu0 0.0
    %1043 = vmatpush1.msra.mxu0 0.0
    %1044 = vmatprep.subr.mxu0 0.0
    %1045 = vmatpush1.msra.mxu0 0.0
    %1046 = vmatprep.subr.mxu0 0.0
    %1047 = vmatpush1.msra.mxu0 0.0
    %1048 = vmatprep.subr.mxu0 0.0
    %1049 = vmatpush1.msra.mxu0 0.0
    %1050 = vmatprep.subr.mxu0 0.0
    %1051 = vmatpush1.msra.mxu0 0.0
    %1052 = vmatprep.subr.mxu0 0.0
    %1053 = vmatpush1.msra.mxu0 0.0
    %1054 = vmatprep.subr.mxu0 0.0
    %1055 = vmatpush1.msra.mxu0 0.0
    %1056 = vmatprep.subr.mxu0 0.0
    %1057 = vmatpush1.msra.mxu0 0.0
    %1058 = vmatprep.subr.mxu0 0.0
    %1059 = vmatpush1.msra.mxu0 0.0
    %1060 = vmatprep.subr.mxu0 0.0
    %1061 = vmatpush1.msra.mxu0 0.0
    %1062 = vmatprep.subr.mxu0 0.0
    %1063 = vmatpush1.msra.mxu0 0.0
    %1064 = vmatprep.subr.mxu0 0.0
    %1065 = vmatpush1.msra.mxu0 0.0
    %1066 = vmatprep.subr.mxu0 0.0
    %1067 = vmatpush1.msra.mxu0 0.0
    %1068 = vmatprep.subr.mxu0 0.0
    %1069 = vmatpush1.msra.mxu0 0.0
    %1070 = vmatprep.mubr.f32.mxu0 0.0
    %v1071 = vand.u32 %v254, 4294901760
    %v1072 = vsub.f32 %v254, %v1071
    %1073 = vmatmul.mubr.f32.gmra.mrb[0].mxu0 %v1072
    %v1074 = vpop.f32.mrb[0].mxu0
    %v1075 = vadd.f32 %v987, %v1074
    %v1076 = vpop.f32.mrb[0].mxu0
    %1077 = vdwg.mxu0
    %1078 = vmatprep.subr.mxu0 0.0
    %v1079 = vand.u32 %v235, 4294901760
    %1080 = vmatpush1.msra.mxu0 %v1079
    %1081 = vmatprep.subr.mxu0 0.0
    %v1082 = vand.u32 %v236, 4294901760
    %1083 = vmatpush1.msra.mxu0 %v1082
    %1084 = vmatprep.subr.mxu0 0.0
    %v1085 = vand.u32 %v237, 4294901760
    %1086 = vmatpush1.msra.mxu0 %v1085
    %1087 = vmatprep.subr.mxu0 0.0
    %v1088 = vand.u32 %v238, 4294901760
    %1089 = vmatpush1.msra.mxu0 %v1088
    %1090 = vmatprep.subr.mxu0 0.0
    %v1091 = vand.u32 %v239, 4294901760
    %1092 = vmatpush1.msra.mxu0 %v1091
    %1093 = vmatprep.subr.mxu0 0.0
    %v1094 = vand.u32 %v240, 4294901760
    %1095 = vmatpush1.msra.mxu0 %v1094
    %1096 = vmatprep.subr.mxu0 0.0
    %v1097 = vand.u32 %v241, 4294901760
    %1098 = vmatpush1.msra.mxu0 %v1097
    %1099 = vmatprep.subr.mxu0 0.0
    %v1100 = vand.u32 %v242, 4294901760
    %1101 = vmatpush1.msra.mxu0 %v1100
    %1102 = vmatprep.subr.mxu0 0.0
    %1103 = vmatpush1.msra.mxu0 0.0
    %1104 = vmatprep.subr.mxu0 0.0
    %1105 = vmatpush1.msra.mxu0 0.0
    %1106 = vmatprep.subr.mxu0 0.0
    %1107 = vmatpush1.msra.mxu0 0.0
    %1108 = vmatprep.subr.mxu0 0.0
    %1109 = vmatpush1.msra.mxu0 0.0
    %1110 = vmatprep.subr.mxu0 0.0
    %1111 = vmatpush1.msra.mxu0 0.0
    %1112 = vmatprep.subr.mxu0 0.0
    %1113 = vmatpush1.msra.mxu0 0.0
    %1114 = vmatprep.subr.mxu0 0.0
    %1115 = vmatpush1.msra.mxu0 0.0
    %1116 = vmatprep.subr.mxu0 0.0
    %1117 = vmatpush1.msra.mxu0 0.0
    %1118 = vmatprep.subr.mxu0 0.0
    %1119 = vmatpush1.msra.mxu0 0.0
    %1120 = vmatprep.subr.mxu0 0.0
    %1121 = vmatpush1.msra.mxu0 0.0
    %1122 = vmatprep.subr.mxu0 0.0
    %1123 = vmatpush1.msra.mxu0 0.0
    %1124 = vmatprep.subr.mxu0 0.0
    %1125 = vmatpush1.msra.mxu0 0.0
    %1126 = vmatprep.subr.mxu0 0.0
    %1127 = vmatpush1.msra.mxu0 0.0
    %1128 = vmatprep.subr.mxu0 0.0
    %1129 = vmatpush1.msra.mxu0 0.0
    %1130 = vmatprep.subr.mxu0 0.0
    %1131 = vmatpush1.msra.mxu0 0.0
    %1132 = vmatprep.subr.mxu0 0.0
    %1133 = vmatpush1.msra.mxu0 0.0
    %1134 = vmatprep.subr.mxu0 0.0
    %1135 = vmatpush1.msra.mxu0 0.0
    %1136 = vmatprep.subr.mxu0 0.0
    %1137 = vmatpush1.msra.mxu0 0.0
    %1138 = vmatprep.subr.mxu0 0.0
    %1139 = vmatpush1.msra.mxu0 0.0
    %1140 = vmatprep.subr.mxu0 0.0
    %1141 = vmatpush1.msra.mxu0 0.0
    %1142 = vmatprep.subr.mxu0 0.0
    %1143 = vmatpush1.msra.mxu0 0.0
    %1144 = vmatprep.subr.mxu0 0.0
    %1145 = vmatpush1.msra.mxu0 0.0
    %1146 = vmatprep.subr.mxu0 0.0
    %1147 = vmatpush1.msra.mxu0 0.0
    %1148 = vmatprep.subr.mxu0 0.0
    %1149 = vmatpush1.msra.mxu0 0.0
    %1150 = vmatprep.mubr.f32.mxu0 0.0
    %v1151 = vand.u32 %v254, 4294901760
    %v1152 = vsub.f32 %v254, %v1151
    %v1153 = vand.u32 %v1152, 4294901760
    %1154 = vmatmul.mubr.f32.gmra.mrb[0].mxu0 %v1153
    %v1155 = vpop.f32.mrb[0].mxu0
    %v1156 = vadd.f32 %v1075, %v1155
    %v1157 = vpop.f32.mrb[0].mxu0
    %1158 = vdwg.mxu0
    %1159 = vmatprep.subr.mxu0 0.0
    %v1160 = vand.u32 %v235, 4294901760
    %v1161 = vsub.f32 %v235, %v1160
    %v1162 = vand.u32 %v1161, 4294901760
    %1163 = vmatpush1.msra.mxu0 %v1162
    %1164 = vmatprep.subr.mxu0 0.0
    %v1165 = vand.u32 %v236, 4294901760
    %v1166 = vsub.f32 %v236, %v1165
    %v1167 = vand.u32 %v1166, 4294901760
    %1168 = vmatpush1.msra.mxu0 %v1167
    %1169 = vmatprep.subr.mxu0 0.0
    %v1170 = vand.u32 %v237, 4294901760
    %v1171 = vsub.f32 %v237, %v1170
    %v1172 = vand.u32 %v1171, 4294901760
    %1173 = vmatpush1.msra.mxu0 %v1172
    %1174 = vmatprep.subr.mxu0 0.0
    %v1175 = vand.u32 %v238, 4294901760
    %v1176 = vsub.f32 %v238, %v1175
    %v1177 = vand.u32 %v1176, 4294901760
    %1178 = vmatpush1.msra.mxu0 %v1177
    %1179 = vmatprep.subr.mxu0 0.0
    %v1180 = vand.u32 %v239, 4294901760
    %v1181 = vsub.f32 %v239, %v1180
    %v1182 = vand.u32 %v1181, 4294901760
    %1183 = vmatpush1.msra.mxu0 %v1182
    %1184 = vmatprep.subr.mxu0 0.0
    %v1185 = vand.u32 %v240, 4294901760
    %v1186 = vsub.f32 %v240, %v1185
    %v1187 = vand.u32 %v1186, 4294901760
    %1188 = vmatpush1.msra.mxu0 %v1187
    %1189 = vmatprep.subr.mxu0 0.0
    %v1190 = vand.u32 %v241, 4294901760
    %v1191 = vsub.f32 %v241, %v1190
    %v1192 = vand.u32 %v1191, 4294901760
    %1193 = vmatpush1.msra.mxu0 %v1192
    %1194 = vmatprep.subr.mxu0 0.0
    %v1195 = vand.u32 %v242, 4294901760
    %v1196 = vsub.f32 %v242, %v1195
    %v1197 = vand.u32 %v1196, 4294901760
    %1198 = vmatpush1.msra.mxu0 %v1197
    %1199 = vmatprep.subr.mxu0 0.0
    %1200 = vmatpush1.msra.mxu0 0.0
    %1201 = vmatprep.subr.mxu0 0.0
    %1202 = vmatpush1.msra.mxu0 0.0
    %1203 = vmatprep.subr.mxu0 0.0
    %1204 = vmatpush1.msra.mxu0 0.0
    %1205 = vmatprep.subr.mxu0 0.0
    %1206 = vmatpush1.msra.mxu0 0.0
    %1207 = vmatprep.subr.mxu0 0.0
    %1208 = vmatpush1.msra.mxu0 0.0
    %1209 = vmatprep.subr.mxu0 0.0
    %1210 = vmatpush1.msra.mxu0 0.0
    %1211 = vmatprep.subr.mxu0 0.0
    %1212 = vmatpush1.msra.mxu0 0.0
    %1213 = vmatprep.subr.mxu0 0.0
    %1214 = vmatpush1.msra.mxu0 0.0
    %1215 = vmatprep.subr.mxu0 0.0
    %1216 = vmatpush1.msra.mxu0 0.0
    %1217 = vmatprep.subr.mxu0 0.0
    %1218 = vmatpush1.msra.mxu0 0.0
    %1219 = vmatprep.subr.mxu0 0.0
    %1220 = vmatpush1.msra.mxu0 0.0
    %1221 = vmatprep.subr.mxu0 0.0
    %1222 = vmatpush1.msra.mxu0 0.0
    %1223 = vmatprep.subr.mxu0 0.0
    %1224 = vmatpush1.msra.mxu0 0.0
    %1225 = vmatprep.subr.mxu0 0.0
    %1226 = vmatpush1.msra.mxu0 0.0
    %1227 = vmatprep.subr.mxu0 0.0
    %1228 = vmatpush1.msra.mxu0 0.0
    %1229 = vmatprep.subr.mxu0 0.0
    %1230 = vmatpush1.msra.mxu0 0.0
    %1231 = vmatprep.subr.mxu0 0.0
    %1232 = vmatpush1.msra.mxu0 0.0
    %1233 = vmatprep.subr.mxu0 0.0
    %1234 = vmatpush1.msra.mxu0 0.0
    %1235 = vmatprep.subr.mxu0 0.0
    %1236 = vmatpush1.msra.mxu0 0.0
    %1237 = vmatprep.subr.mxu0 0.0
    %1238 = vmatpush1.msra.mxu0 0.0
    %1239 = vmatprep.subr.mxu0 0.0
    %1240 = vmatpush1.msra.mxu0 0.0
    %1241 = vmatprep.subr.mxu0 0.0
    %1242 = vmatpush1.msra.mxu0 0.0
    %1243 = vmatprep.subr.mxu0 0.0
    %1244 = vmatpush1.msra.mxu0 0.0
    %1245 = vmatprep.subr.mxu0 0.0
    %1246 = vmatpush1.msra.mxu0 0.0
    %1247 = vmatprep.mubr.f32.mxu0 0.0
    %v1248 = vand.u32 %v254, 4294901760
    %1249 = vmatmul.mubr.f32.gmra.mrb[0].mxu0 %v1248
    %v1250 = vpop.f32.mrb[0].mxu0
    %v1251 = vadd.f32 %v1156, %v1250
    %v1252 = vpop.f32.mrb[0].mxu0
    %1253 = vdwg.mxu0
    %1254 = vmatprep.subr.mxu0 0.0
    %v1255 = vand.u32 %v235, 4294901760
    %1256 = vmatpush1.msra.mxu0 %v1255
    %1257 = vmatprep.subr.mxu0 0.0
    %v1258 = vand.u32 %v236, 4294901760
    %1259 = vmatpush1.msra.mxu0 %v1258
    %1260 = vmatprep.subr.mxu0 0.0
    %v1261 = vand.u32 %v237, 4294901760
    %1262 = vmatpush1.msra.mxu0 %v1261
    %1263 = vmatprep.subr.mxu0 0.0
    %v1264 = vand.u32 %v238, 4294901760
    %1265 = vmatpush1.msra.mxu0 %v1264
    %1266 = vmatprep.subr.mxu0 0.0
    %v1267 = vand.u32 %v239, 4294901760
    %1268 = vmatpush1.msra.mxu0 %v1267
    %1269 = vmatprep.subr.mxu0 0.0
    %v1270 = vand.u32 %v240, 4294901760
    %1271 = vmatpush1.msra.mxu0 %v1270
    %1272 = vmatprep.subr.mxu0 0.0
    %v1273 = vand.u32 %v241, 4294901760
    %1274 = vmatpush1.msra.mxu0 %v1273
    %1275 = vmatprep.subr.mxu0 0.0
    %v1276 = vand.u32 %v242, 4294901760
    %1277 = vmatpush1.msra.mxu0 %v1276
    %1278 = vmatprep.subr.mxu0 0.0
    %1279 = vmatpush1.msra.mxu0 0.0
    %1280 = vmatprep.subr.mxu0 0.0
    %1281 = vmatpush1.msra.mxu0 0.0
    %1282 = vmatprep.subr.mxu0 0.0
    %1283 = vmatpush1.msra.mxu0 0.0
    %1284 = vmatprep.subr.mxu0 0.0
    %1285 = vmatpush1.msra.mxu0 0.0
    %1286 = vmatprep.subr.mxu0 0.0
    %1287 = vmatpush1.msra.mxu0 0.0
    %1288 = vmatprep.subr.mxu0 0.0
    %1289 = vmatpush1.msra.mxu0 0.0
    %1290 = vmatprep.subr.mxu0 0.0
    %1291 = vmatpush1.msra.mxu0 0.0
    %1292 = vmatprep.subr.mxu0 0.0
    %1293 = vmatpush1.msra.mxu0 0.0
    %1294 = vmatprep.subr.mxu0 0.0
    %1295 = vmatpush1.msra.mxu0 0.0
    %1296 = vmatprep.subr.mxu0 0.0
    %1297 = vmatpush1.msra.mxu0 0.0
    %1298 = vmatprep.subr.mxu0 0.0
    %1299 = vmatpush1.msra.mxu0 0.0
    %1300 = vmatprep.subr.mxu0 0.0
    %1301 = vmatpush1.msra.mxu0 0.0
    %1302 = vmatprep.subr.mxu0 0.0
    %1303 = vmatpush1.msra.mxu0 0.0
    %1304 = vmatprep.subr.mxu0 0.0
    %1305 = vmatpush1.msra.mxu0 0.0
    %1306 = vmatprep.subr.mxu0 0.0
    %1307 = vmatpush1.msra.mxu0 0.0
    %1308 = vmatprep.subr.mxu0 0.0
    %1309 = vmatpush1.msra.mxu0 0.0
    %1310 = vmatprep.subr.mxu0 0.0
    %1311 = vmatpush1.msra.mxu0 0.0
    %1312 = vmatprep.subr.mxu0 0.0
    %1313 = vmatpush1.msra.mxu0 0.0
    %1314 = vmatprep.subr.mxu0 0.0
    %1315 = vmatpush1.msra.mxu0 0.0
    %1316 = vmatprep.subr.mxu0 0.0
    %1317 = vmatpush1.msra.mxu0 0.0
    %1318 = vmatprep.subr.mxu0 0.0
    %1319 = vmatpush1.msra.mxu0 0.0
    %1320 = vmatprep.subr.mxu0 0.0
    %1321 = vmatpush1.msra.mxu0 0.0
    %1322 = vmatprep.subr.mxu0 0.0
    %1323 = vmatpush1.msra.mxu0 0.0
    %1324 = vmatprep.subr.mxu0 0.0
    %1325 = vmatpush1.msra.mxu0 0.0
    %1326 = vmatprep.mubr.f32.mxu0 0.0
    %v1327 = vand.u32 %v254, 4294901760
    %1328 = vmatmul.mubr.f32.gmra.mrb[0].mxu0 %v1327
    %v1329 = vpop.f32.mrb[0].mxu0
    %v1330 = vadd.f32 %v1251, %v1329
    %v1331 = vpop.f32.mrb[0].mxu0
    %1332 = vdwg.mxu0
    %v1333 = vadd.f32 %v795, %v1330
    %1334 = vst.msk [vmem:[#allocation4] sm:$0xff] %vm154, %v1333
    %v1335 = vld [vmem:[#allocation6] sm:$0xff]
    %1336 = vmatprep.subr.mxu0 0.0
    %v1337 = vand.u32 %v146, 4294901760
    %1338 = vmatpush1.msra.mxu0 %v1337
    %1339 = vmatprep.subr.mxu0 0.0
    %v1340 = vand.u32 %v147, 4294901760
    %1341 = vmatpush1.msra.mxu0 %v1340
    %1342 = vmatprep.subr.mxu0 0.0
    %v1343 = vand.u32 %v148, 4294901760
    %1344 = vmatpush1.msra.mxu0 %v1343
    %1345 = vmatprep.subr.mxu0 0.0
    %v1346 = vand.u32 %v149, 4294901760
    %1347 = vmatpush1.msra.mxu0 %v1346
    %1348 = vmatprep.subr.mxu0 0.0
    %v1349 = vand.u32 %v150, 4294901760
    %1350 = vmatpush1.msra.mxu0 %v1349
    %1351 = vmatprep.subr.mxu0 0.0
    %v1352 = vand.u32 %v151, 4294901760
    %1353 = vmatpush1.msra.mxu0 %v1352
    %1354 = vmatprep.subr.mxu0 0.0
    %v1355 = vand.u32 %v152, 4294901760
    %1356 = vmatpush1.msra.mxu0 %v1355
    %1357 = vmatprep.subr.mxu0 0.0
    %v1358 = vand.u32 %v153, 4294901760
    %1359 = vmatpush1.msra.mxu0 %v1358
    %1360 = vmatprep.subr.mxu0 0.0
    %1361 = vmatpush1.msra.mxu0 0.0
    %1362 = vmatprep.subr.mxu0 0.0
    %1363 = vmatpush1.msra.mxu0 0.0
    %1364 = vmatprep.subr.mxu0 0.0
    %1365 = vmatpush1.msra.mxu0 0.0
    %1366 = vmatprep.subr.mxu0 0.0
    %1367 = vmatpush1.msra.mxu0 0.0
    %1368 = vmatprep.subr.mxu0 0.0
    %1369 = vmatpush1.msra.mxu0 0.0
    %1370 = vmatprep.subr.mxu0 0.0
    %1371 = vmatpush1.msra.mxu0 0.0
    %1372 = vmatprep.subr.mxu0 0.0
    %1373 = vmatpush1.msra.mxu0 0.0
    %1374 = vmatprep.subr.mxu0 0.0
    %1375 = vmatpush1.msra.mxu0 0.0
    %1376 = vmatprep.subr.mxu0 0.0
    %1377 = vmatpush1.msra.mxu0 0.0
    %1378 = vmatprep.subr.mxu0 0.0
    %1379 = vmatpush1.msra.mxu0 0.0
    %1380 = vmatprep.subr.mxu0 0.0
    %1381 = vmatpush1.msra.mxu0 0.0
    %1382 = vmatprep.subr.mxu0 0.0
    %1383 = vmatpush1.msra.mxu0 0.0
    %1384 = vmatprep.subr.mxu0 0.0
    %1385 = vmatpush1.msra.mxu0 0.0
    %1386 = vmatprep.subr.mxu0 0.0
    %1387 = vmatpush1.msra.mxu0 0.0
    %1388 = vmatprep.subr.mxu0 0.0
    %1389 = vmatpush1.msra.mxu0 0.0
    %1390 = vmatprep.subr.mxu0 0.0
    %1391 = vmatpush1.msra.mxu0 0.0
    %1392 = vmatprep.subr.mxu0 0.0
    %1393 = vmatpush1.msra.mxu0 0.0
    %1394 = vmatprep.subr.mxu0 0.0
    %1395 = vmatpush1.msra.mxu0 0.0
    %1396 = vmatprep.subr.mxu0 0.0
    %1397 = vmatpush1.msra.mxu0 0.0
    %1398 = vmatprep.subr.mxu0 0.0
    %1399 = vmatpush1.msra.mxu0 0.0
    %1400 = vmatprep.subr.mxu0 0.0
    %1401 = vmatpush1.msra.mxu0 0.0
    %1402 = vmatprep.subr.mxu0 0.0
    %1403 = vmatpush1.msra.mxu0 0.0
    %1404 = vmatprep.subr.mxu0 0.0
    %1405 = vmatpush1.msra.mxu0 0.0
    %1406 = vmatprep.subr.mxu0 0.0
    %1407 = vmatpush1.msra.mxu0 0.0
    %1408 = vmatprep.mubr.f32.mxu0 0.0
    %v1409 = vand.u32 %v254, 4294901760
    %v1410 = vsub.f32 %v254, %v1409
    %v1411 = vand.u32 %v1410, 4294901760
    %v1412 = vsub.f32 %v1410, %v1411
    %v1413 = vand.u32 %v1412, 4294901760
    %1414 = vmatmul.mubr.f32.gmra.mrb[0].mxu0 %v1413
    %v1415 = vpop.f32.mrb[0].mxu0
    %v1416 = vadd.f32 0.0, %v1415
    %v1417 = vpop.f32.mrb[0].mxu0
    %1418 = vdwg.mxu0
    %1419 = vmatprep.subr.mxu0 0.0
    %v1420 = vand.u32 %v146, 4294901760
    %v1421 = vsub.f32 %v146, %v1420
    %v1422 = vand.u32 %v1421, 4294901760
    %v1423 = vsub.f32 %v1421, %v1422
    %v1424 = vand.u32 %v1423, 4294901760
    %1425 = vmatpush1.msra.mxu0 %v1424
    %1426 = vmatprep.subr.mxu0 0.0
    %v1427 = vand.u32 %v147, 4294901760
    %v1428 = vsub.f32 %v147, %v1427
    %v1429 = vand.u32 %v1428, 4294901760
    %v1430 = vsub.f32 %v1428, %v1429
    %v1431 = vand.u32 %v1430, 4294901760
    %1432 = vmatpush1.msra.mxu0 %v1431
    %1433 = vmatprep.subr.mxu0 0.0
    %v1434 = vand.u32 %v148, 4294901760
    %v1435 = vsub.f32 %v148, %v1434
    %v1436 = vand.u32 %v1435, 4294901760
    %v1437 = vsub.f32 %v1435, %v1436
    %v1438 = vand.u32 %v1437, 4294901760
    %1439 = vmatpush1.msra.mxu0 %v1438
    %1440 = vmatprep.subr.mxu0 0.0
    %v1441 = vand.u32 %v149, 4294901760
    %v1442 = vsub.f32 %v149, %v1441
    %v1443 = vand.u32 %v1442, 4294901760
    %v1444 = vsub.f32 %v1442, %v1443
    %v1445 = vand.u32 %v1444, 4294901760
    %1446 = vmatpush1.msra.mxu0 %v1445
    %1447 = vmatprep.subr.mxu0 0.0
    %v1448 = vand.u32 %v150, 4294901760
    %v1449 = vsub.f32 %v150, %v1448
    %v1450 = vand.u32 %v1449, 4294901760
    %v1451 = vsub.f32 %v1449, %v1450
    %v1452 = vand.u32 %v1451, 4294901760
    %1453 = vmatpush1.msra.mxu0 %v1452
    %1454 = vmatprep.subr.mxu0 0.0
    %v1455 = vand.u32 %v151, 4294901760
    %v1456 = vsub.f32 %v151, %v1455
    %v1457 = vand.u32 %v1456, 4294901760
    %v1458 = vsub.f32 %v1456, %v1457
    %v1459 = vand.u32 %v1458, 4294901760
    %1460 = vmatpush1.msra.mxu0 %v1459
    %1461 = vmatprep.subr.mxu0 0.0
    %v1462 = vand.u32 %v152, 4294901760
    %v1463 = vsub.f32 %v152, %v1462
    %v1464 = vand.u32 %v1463, 4294901760
    %v1465 = vsub.f32 %v1463, %v1464
    %v1466 = vand.u32 %v1465, 4294901760
    %1467 = vmatpush1.msra.mxu0 %v1466
    %1468 = vmatprep.subr.mxu0 0.0
    %v1469 = vand.u32 %v153, 4294901760
    %v1470 = vsub.f32 %v153, %v1469
    %v1471 = vand.u32 %v1470, 4294901760
    %v1472 = vsub.f32 %v1470, %v1471
    %v1473 = vand.u32 %v1472, 4294901760
    %1474 = vmatpush1.msra.mxu0 %v1473
    %1475 = vmatprep.subr.mxu0 0.0
    %1476 = vmatpush1.msra.mxu0 0.0
    %1477 = vmatprep.subr.mxu0 0.0
    %1478 = vmatpush1.msra.mxu0 0.0
    %1479 = vmatprep.subr.mxu0 0.0
    %1480 = vmatpush1.msra.mxu0 0.0
    %1481 = vmatprep.subr.mxu0 0.0
    %1482 = vmatpush1.msra.mxu0 0.0
    %1483 = vmatprep.subr.mxu0 0.0
    %1484 = vmatpush1.msra.mxu0 0.0
    %1485 = vmatprep.subr.mxu0 0.0
    %1486 = vmatpush1.msra.mxu0 0.0
    %1487 = vmatprep.subr.mxu0 0.0
    %1488 = vmatpush1.msra.mxu0 0.0
    %1489 = vmatprep.subr.mxu0 0.0
    %1490 = vmatpush1.msra.mxu0 0.0
    %1491 = vmatprep.subr.mxu0 0.0
    %1492 = vmatpush1.msra.mxu0 0.0
    %1493 = vmatprep.subr.mxu0 0.0
    %1494 = vmatpush1.msra.mxu0 0.0
    %1495 = vmatprep.subr.mxu0 0.0
    %1496 = vmatpush1.msra.mxu0 0.0
    %1497 = vmatprep.subr.mxu0 0.0
    %1498 = vmatpush1.msra.mxu0 0.0
    %1499 = vmatprep.subr.mxu0 0.0
    %1500 = vmatpush1.msra.mxu0 0.0
    %1501 = vmatprep.subr.mxu0 0.0
    %1502 = vmatpush1.msra.mxu0 0.0
    %1503 = vmatprep.subr.mxu0 0.0
    %1504 = vmatpush1.msra.mxu0 0.0
    %1505 = vmatprep.subr.mxu0 0.0
    %1506 = vmatpush1.msra.mxu0 0.0
    %1507 = vmatprep.subr.mxu0 0.0
    %1508 = vmatpush1.msra.mxu0 0.0
    %1509 = vmatprep.subr.mxu0 0.0
    %1510 = vmatpush1.msra.mxu0 0.0
    %1511 = vmatprep.subr.mxu0 0.0
    %1512 = vmatpush1.msra.mxu0 0.0
    %1513 = vmatprep.subr.mxu0 0.0
    %1514 = vmatpush1.msra.mxu0 0.0
    %1515 = vmatprep.subr.mxu0 0.0
    %1516 = vmatpush1.msra.mxu0 0.0
    %1517 = vmatprep.subr.mxu0 0.0
    %1518 = vmatpush1.msra.mxu0 0.0
    %1519 = vmatprep.subr.mxu0 0.0
    %1520 = vmatpush1.msra.mxu0 0.0
    %1521 = vmatprep.subr.mxu0 0.0
    %1522 = vmatpush1.msra.mxu0 0.0
    %1523 = vmatprep.mubr.f32.mxu0 0.0
    %v1524 = vand.u32 %v254, 4294901760
    %1525 = vmatmul.mubr.f32.gmra.mrb[0].mxu0 %v1524
    %v1526 = vpop.f32.mrb[0].mxu0
    %v1527 = vadd.f32 %v1416, %v1526
    %v1528 = vpop.f32.mrb[0].mxu0
    %1529 = vdwg.mxu0
    %1530 = vmatprep.subr.mxu0 0.0
    %v1531 = vand.u32 %v146, 4294901760
    %v1532 = vsub.f32 %v146, %v1531
    %1533 = vmatpush1.msra.mxu0 %v1532
    %1534 = vmatprep.subr.mxu0 0.0
    %v1535 = vand.u32 %v147, 4294901760
    %v1536 = vsub.f32 %v147, %v1535
    %1537 = vmatpush1.msra.mxu0 %v1536
    %1538 = vmatprep.subr.mxu0 0.0
    %v1539 = vand.u32 %v148, 4294901760
    %v1540 = vsub.f32 %v148, %v1539
    %1541 = vmatpush1.msra.mxu0 %v1540
    %1542 = vmatprep.subr.mxu0 0.0
    %v1543 = vand.u32 %v149, 4294901760
    %v1544 = vsub.f32 %v149, %v1543
    %1545 = vmatpush1.msra.mxu0 %v1544
    %1546 = vmatprep.subr.mxu0 0.0
    %v1547 = vand.u32 %v150, 4294901760
    %v1548 = vsub.f32 %v150, %v1547
    %1549 = vmatpush1.msra.mxu0 %v1548
    %1550 = vmatprep.subr.mxu0 0.0
    %v1551 = vand.u32 %v151, 4294901760
    %v1552 = vsub.f32 %v151, %v1551
    %1553 = vmatpush1.msra.mxu0 %v1552
    %1554 = vmatprep.subr.mxu0 0.0
    %v1555 = vand.u32 %v152, 4294901760
    %v1556 = vsub.f32 %v152, %v1555
    %1557 = vmatpush1.msra.mxu0 %v1556
    %1558 = vmatprep.subr.mxu0 0.0
    %v1559 = vand.u32 %v153, 4294901760
    %v1560 = vsub.f32 %v153, %v1559
    %1561 = vmatpush1.msra.mxu0 %v1560
    %1562 = vmatprep.subr.mxu0 0.0
    %1563 = vmatpush1.msra.mxu0 0.0
    %1564 = vmatprep.subr.mxu0 0.0
    %1565 = vmatpush1.msra.mxu0 0.0
    %1566 = vmatprep.subr.mxu0 0.0
    %1567 = vmatpush1.msra.mxu0 0.0
    %1568 = vmatprep.subr.mxu0 0.0
    %1569 = vmatpush1.msra.mxu0 0.0
    %1570 = vmatprep.subr.mxu0 0.0
    %1571 = vmatpush1.msra.mxu0 0.0
    %1572 = vmatprep.subr.mxu0 0.0
    %1573 = vmatpush1.msra.mxu0 0.0
    %1574 = vmatprep.subr.mxu0 0.0
    %1575 = vmatpush1.msra.mxu0 0.0
    %1576 = vmatprep.subr.mxu0 0.0
    %1577 = vmatpush1.msra.mxu0 0.0
    %1578 = vmatprep.subr.mxu0 0.0
    %1579 = vmatpush1.msra.mxu0 0.0
    %1580 = vmatprep.subr.mxu0 0.0
    %1581 = vmatpush1.msra.mxu0 0.0
    %1582 = vmatprep.subr.mxu0 0.0
    %1583 = vmatpush1.msra.mxu0 0.0
    %1584 = vmatprep.subr.mxu0 0.0
    %1585 = vmatpush1.msra.mxu0 0.0
    %1586 = vmatprep.subr.mxu0 0.0
    %1587 = vmatpush1.msra.mxu0 0.0
    %1588 = vmatprep.subr.mxu0 0.0
    %1589 = vmatpush1.msra.mxu0 0.0
    %1590 = vmatprep.subr.mxu0 0.0
    %1591 = vmatpush1.msra.mxu0 0.0
    %1592 = vmatprep.subr.mxu0 0.0
    %1593 = vmatpush1.msra.mxu0 0.0
    %1594 = vmatprep.subr.mxu0 0.0
    %1595 = vmatpush1.msra.mxu0 0.0
    %1596 = vmatprep.subr.mxu0 0.0
    %1597 = vmatpush1.msra.mxu0 0.0
    %1598 = vmatprep.subr.mxu0 0.0
    %1599 = vmatpush1.msra.mxu0 0.0
    %1600 = vmatprep.subr.mxu0 0.0
    %1601 = vmatpush1.msra.mxu0 0.0
    %1602 = vmatprep.subr.mxu0 0.0
    %1603 = vmatpush1.msra.mxu0 0.0
    %1604 = vmatprep.subr.mxu0 0.0
    %1605 = vmatpush1.msra.mxu0 0.0
    %1606 = vmatprep.subr.mxu0 0.0
    %1607 = vmatpush1.msra.mxu0 0.0
    %1608 = vmatprep.subr.mxu0 0.0
    %1609 = vmatpush1.msra.mxu0 0.0
    %1610 = vmatprep.mubr.f32.mxu0 0.0
    %v1611 = vand.u32 %v254, 4294901760
    %v1612 = vsub.f32 %v254, %v1611
    %1613 = vmatmul.mubr.f32.gmra.mrb[0].mxu0 %v1612
    %v1614 = vpop.f32.mrb[0].mxu0
    %v1615 = vadd.f32 %v1527, %v1614
    %v1616 = vpop.f32.mrb[0].mxu0
    %1617 = vdwg.mxu0
    %1618 = vmatprep.subr.mxu0 0.0
    %v1619 = vand.u32 %v146, 4294901760
    %1620 = vmatpush1.msra.mxu0 %v1619
    %1621 = vmatprep.subr.mxu0 0.0
    %v1622 = vand.u32 %v147, 4294901760
    %1623 = vmatpush1.msra.mxu0 %v1622
    %1624 = vmatprep.subr.mxu0 0.0
    %v1625 = vand.u32 %v148, 4294901760
    %1626 = vmatpush1.msra.mxu0 %v1625
    %1627 = vmatprep.subr.mxu0 0.0
    %v1628 = vand.u32 %v149, 4294901760
    %1629 = vmatpush1.msra.mxu0 %v1628
    %1630 = vmatprep.subr.mxu0 0.0
    %v1631 = vand.u32 %v150, 4294901760
    %1632 = vmatpush1.msra.mxu0 %v1631
    %1633 = vmatprep.subr.mxu0 0.0
    %v1634 = vand.u32 %v151, 4294901760
    %1635 = vmatpush1.msra.mxu0 %v1634
    %1636 = vmatprep.subr.mxu0 0.0
    %v1637 = vand.u32 %v152, 4294901760
    %1638 = vmatpush1.msra.mxu0 %v1637
    %1639 = vmatprep.subr.mxu0 0.0
    %v1640 = vand.u32 %v153, 4294901760
    %1641 = vmatpush1.msra.mxu0 %v1640
    %1642 = vmatprep.subr.mxu0 0.0
    %1643 = vmatpush1.msra.mxu0 0.0
    %1644 = vmatprep.subr.mxu0 0.0
    %1645 = vmatpush1.msra.mxu0 0.0
    %1646 = vmatprep.subr.mxu0 0.0
    %1647 = vmatpush1.msra.mxu0 0.0
    %1648 = vmatprep.subr.mxu0 0.0
    %1649 = vmatpush1.msra.mxu0 0.0
    %1650 = vmatprep.subr.mxu0 0.0
    %1651 = vmatpush1.msra.mxu0 0.0
    %1652 = vmatprep.subr.mxu0 0.0
    %1653 = vmatpush1.msra.mxu0 0.0
    %1654 = vmatprep.subr.mxu0 0.0
    %1655 = vmatpush1.msra.mxu0 0.0
    %1656 = vmatprep.subr.mxu0 0.0
    %1657 = vmatpush1.msra.mxu0 0.0
    %1658 = vmatprep.subr.mxu0 0.0
    %1659 = vmatpush1.msra.mxu0 0.0
    %1660 = vmatprep.subr.mxu0 0.0
    %1661 = vmatpush1.msra.mxu0 0.0
    %1662 = vmatprep.subr.mxu0 0.0
    %1663 = vmatpush1.msra.mxu0 0.0
    %1664 = vmatprep.subr.mxu0 0.0
    %1665 = vmatpush1.msra.mxu0 0.0
    %1666 = vmatprep.subr.mxu0 0.0
    %1667 = vmatpush1.msra.mxu0 0.0
    %1668 = vmatprep.subr.mxu0 0.0
    %1669 = vmatpush1.msra.mxu0 0.0
    %1670 = vmatprep.subr.mxu0 0.0
    %1671 = vmatpush1.msra.mxu0 0.0
    %1672 = vmatprep.subr.mxu0 0.0
    %1673 = vmatpush1.msra.mxu0 0.0
    %1674 = vmatprep.subr.mxu0 0.0
    %1675 = vmatpush1.msra.mxu0 0.0
    %1676 = vmatprep.subr.mxu0 0.0
    %1677 = vmatpush1.msra.mxu0 0.0
    %1678 = vmatprep.subr.mxu0 0.0
    %1679 = vmatpush1.msra.mxu0 0.0
    %1680 = vmatprep.subr.mxu0 0.0
    %1681 = vmatpush1.msra.mxu0 0.0
    %1682 = vmatprep.subr.mxu0 0.0
    %1683 = vmatpush1.msra.mxu0 0.0
    %1684 = vmatprep.subr.mxu0 0.0
    %1685 = vmatpush1.msra.mxu0 0.0
    %1686 = vmatprep.subr.mxu0 0.0
    %1687 = vmatpush1.msra.mxu0 0.0
    %1688 = vmatprep.subr.mxu0 0.0
    %1689 = vmatpush1.msra.mxu0 0.0
    %1690 = vmatprep.mubr.f32.mxu0 0.0
    %v1691 = vand.u32 %v254, 4294901760
    %v1692 = vsub.f32 %v254, %v1691
    %v1693 = vand.u32 %v1692, 4294901760
    %1694 = vmatmul.mubr.f32.gmra.mrb[0].mxu0 %v1693
    %v1695 = vpop.f32.mrb[0].mxu0
    %v1696 = vadd.f32 %v1615, %v1695
    %v1697 = vpop.f32.mrb[0].mxu0
    %1698 = vdwg.mxu0
    %1699 = vmatprep.subr.mxu0 0.0
    %v1700 = vand.u32 %v146, 4294901760
    %v1701 = vsub.f32 %v146, %v1700
    %v1702 = vand.u32 %v1701, 4294901760
    %1703 = vmatpush1.msra.mxu0 %v1702
    %1704 = vmatprep.subr.mxu0 0.0
    %v1705 = vand.u32 %v147, 4294901760
    %v1706 = vsub.f32 %v147, %v1705
    %v1707 = vand.u32 %v1706, 4294901760
    %1708 = vmatpush1.msra.mxu0 %v1707
    %1709 = vmatprep.subr.mxu0 0.0
    %v1710 = vand.u32 %v148, 4294901760
    %v1711 = vsub.f32 %v148, %v1710
    %v1712 = vand.u32 %v1711, 4294901760
    %1713 = vmatpush1.msra.mxu0 %v1712
    %1714 = vmatprep.subr.mxu0 0.0
    %v1715 = vand.u32 %v149, 4294901760
    %v1716 = vsub.f32 %v149, %v1715
    %v1717 = vand.u32 %v1716, 4294901760
    %1718 = vmatpush1.msra.mxu0 %v1717
    %1719 = vmatprep.subr.mxu0 0.0
    %v1720 = vand.u32 %v150, 4294901760
    %v1721 = vsub.f32 %v150, %v1720
    %v1722 = vand.u32 %v1721, 4294901760
    %1723 = vmatpush1.msra.mxu0 %v1722
    %1724 = vmatprep.subr.mxu0 0.0
    %v1725 = vand.u32 %v151, 4294901760
    %v1726 = vsub.f32 %v151, %v1725
    %v1727 = vand.u32 %v1726, 4294901760
    %1728 = vmatpush1.msra.mxu0 %v1727
    %1729 = vmatprep.subr.mxu0 0.0
    %v1730 = vand.u32 %v152, 4294901760
    %v1731 = vsub.f32 %v152, %v1730
    %v1732 = vand.u32 %v1731, 4294901760
    %1733 = vmatpush1.msra.mxu0 %v1732
    %1734 = vmatprep.subr.mxu0 0.0
    %v1735 = vand.u32 %v153, 4294901760
    %v1736 = vsub.f32 %v153, %v1735
    %v1737 = vand.u32 %v1736, 4294901760
    %1738 = vmatpush1.msra.mxu0 %v1737
    %1739 = vmatprep.subr.mxu0 0.0
    %1740 = vmatpush1.msra.mxu0 0.0
    %1741 = vmatprep.subr.mxu0 0.0
    %1742 = vmatpush1.msra.mxu0 0.0
    %1743 = vmatprep.subr.mxu0 0.0
    %1744 = vmatpush1.msra.mxu0 0.0
    %1745 = vmatprep.subr.mxu0 0.0
    %1746 = vmatpush1.msra.mxu0 0.0
    %1747 = vmatprep.subr.mxu0 0.0
    %1748 = vmatpush1.msra.mxu0 0.0
    %1749 = vmatprep.subr.mxu0 0.0
    %1750 = vmatpush1.msra.mxu0 0.0
    %1751 = vmatprep.subr.mxu0 0.0
    %1752 = vmatpush1.msra.mxu0 0.0
    %1753 = vmatprep.subr.mxu0 0.0
    %1754 = vmatpush1.msra.mxu0 0.0
    %1755 = vmatprep.subr.mxu0 0.0
    %1756 = vmatpush1.msra.mxu0 0.0
    %1757 = vmatprep.subr.mxu0 0.0
    %1758 = vmatpush1.msra.mxu0 0.0
    %1759 = vmatprep.subr.mxu0 0.0
    %1760 = vmatpush1.msra.mxu0 0.0
    %1761 = vmatprep.subr.mxu0 0.0
    %1762 = vmatpush1.msra.mxu0 0.0
    %1763 = vmatprep.subr.mxu0 0.0
    %1764 = vmatpush1.msra.mxu0 0.0
    %1765 = vmatprep.subr.mxu0 0.0
    %1766 = vmatpush1.msra.mxu0 0.0
    %1767 = vmatprep.subr.mxu0 0.0
    %1768 = vmatpush1.msra.mxu0 0.0
    %1769 = vmatprep.subr.mxu0 0.0
    %1770 = vmatpush1.msra.mxu0 0.0
    %1771 = vmatprep.subr.mxu0 0.0
    %1772 = vmatpush1.msra.mxu0 0.0
    %1773 = vmatprep.subr.mxu0 0.0
    %1774 = vmatpush1.msra.mxu0 0.0
    %1775 = vmatprep.subr.mxu0 0.0
    %1776 = vmatpush1.msra.mxu0 0.0
    %1777 = vmatprep.subr.mxu0 0.0
    %1778 = vmatpush1.msra.mxu0 0.0
    %1779 = vmatprep.subr.mxu0 0.0
    %1780 = vmatpush1.msra.mxu0 0.0
    %1781 = vmatprep.subr.mxu0 0.0
    %1782 = vmatpush1.msra.mxu0 0.0
    %1783 = vmatprep.subr.mxu0 0.0
    %1784 = vmatpush1.msra.mxu0 0.0
    %1785 = vmatprep.subr.mxu0 0.0
    %1786 = vmatpush1.msra.mxu0 0.0
    %1787 = vmatprep.mubr.f32.mxu0 0.0
    %v1788 = vand.u32 %v254, 4294901760
    %1789 = vmatmul.mubr.f32.gmra.mrb[0].mxu0 %v1788
    %v1790 = vpop.f32.mrb[0].mxu0
    %v1791 = vadd.f32 %v1696, %v1790
    %v1792 = vpop.f32.mrb[0].mxu0
    %1793 = vdwg.mxu0
    %1794 = vmatprep.subr.mxu0 0.0
    %v1795 = vand.u32 %v146, 4294901760
    %1796 = vmatpush1.msra.mxu0 %v1795
    %1797 = vmatprep.subr.mxu0 0.0
    %v1798 = vand.u32 %v147, 4294901760
    %1799 = vmatpush1.msra.mxu0 %v1798
    %1800 = vmatprep.subr.mxu0 0.0
    %v1801 = vand.u32 %v148, 4294901760
    %1802 = vmatpush1.msra.mxu0 %v1801
    %1803 = vmatprep.subr.mxu0 0.0
    %v1804 = vand.u32 %v149, 4294901760
    %1805 = vmatpush1.msra.mxu0 %v1804
    %1806 = vmatprep.subr.mxu0 0.0
    %v1807 = vand.u32 %v150, 4294901760
    %1808 = vmatpush1.msra.mxu0 %v1807
    %1809 = vmatprep.subr.mxu0 0.0
    %v1810 = vand.u32 %v151, 4294901760
    %1811 = vmatpush1.msra.mxu0 %v1810
    %1812 = vmatprep.subr.mxu0 0.0
    %v1813 = vand.u32 %v152, 4294901760
    %1814 = vmatpush1.msra.mxu0 %v1813
    %1815 = vmatprep.subr.mxu0 0.0
    %v1816 = vand.u32 %v153, 4294901760
    %1817 = vmatpush1.msra.mxu0 %v1816
    %1818 = vmatprep.subr.mxu0 0.0
    %1819 = vmatpush1.msra.mxu0 0.0
    %1820 = vmatprep.subr.mxu0 0.0
    %1821 = vmatpush1.msra.mxu0 0.0
    %1822 = vmatprep.subr.mxu0 0.0
    %1823 = vmatpush1.msra.mxu0 0.0
    %1824 = vmatprep.subr.mxu0 0.0
    %1825 = vmatpush1.msra.mxu0 0.0
    %1826 = vmatprep.subr.mxu0 0.0
    %1827 = vmatpush1.msra.mxu0 0.0
    %1828 = vmatprep.subr.mxu0 0.0
    %1829 = vmatpush1.msra.mxu0 0.0
    %1830 = vmatprep.subr.mxu0 0.0
    %1831 = vmatpush1.msra.mxu0 0.0
    %1832 = vmatprep.subr.mxu0 0.0
    %1833 = vmatpush1.msra.mxu0 0.0
    %1834 = vmatprep.subr.mxu0 0.0
    %1835 = vmatpush1.msra.mxu0 0.0
    %1836 = vmatprep.subr.mxu0 0.0
    %1837 = vmatpush1.msra.mxu0 0.0
    %1838 = vmatprep.subr.mxu0 0.0
    %1839 = vmatpush1.msra.mxu0 0.0
    %1840 = vmatprep.subr.mxu0 0.0
    %1841 = vmatpush1.msra.mxu0 0.0
    %1842 = vmatprep.subr.mxu0 0.0
    %1843 = vmatpush1.msra.mxu0 0.0
    %1844 = vmatprep.subr.mxu0 0.0
    %1845 = vmatpush1.msra.mxu0 0.0
    %1846 = vmatprep.subr.mxu0 0.0
    %1847 = vmatpush1.msra.mxu0 0.0
    %1848 = vmatprep.subr.mxu0 0.0
    %1849 = vmatpush1.msra.mxu0 0.0
    %1850 = vmatprep.subr.mxu0 0.0
    %1851 = vmatpush1.msra.mxu0 0.0
    %1852 = vmatprep.subr.mxu0 0.0
    %1853 = vmatpush1.msra.mxu0 0.0
    %1854 = vmatprep.subr.mxu0 0.0
    %1855 = vmatpush1.msra.mxu0 0.0
    %1856 = vmatprep.subr.mxu0 0.0
    %1857 = vmatpush1.msra.mxu0 0.0
    %1858 = vmatprep.subr.mxu0 0.0
    %1859 = vmatpush1.msra.mxu0 0.0
    %1860 = vmatprep.subr.mxu0 0.0
    %1861 = vmatpush1.msra.mxu0 0.0
    %1862 = vmatprep.subr.mxu0 0.0
    %1863 = vmatpush1.msra.mxu0 0.0
    %1864 = vmatprep.subr.mxu0 0.0
    %1865 = vmatpush1.msra.mxu0 0.0
    %1866 = vmatprep.mubr.f32.mxu0 0.0
    %v1867 = vand.u32 %v254, 4294901760
    %1868 = vmatmul.mubr.f32.gmra.mrb[0].mxu0 %v1867
    %v1869 = vpop.f32.mrb[0].mxu0
    %v1870 = vadd.f32 %v1791, %v1869
    %v1871 = vpop.f32.mrb[0].mxu0
    %1872 = vdwg.mxu0
    %v1873 = vadd.f32 %v1335, %v1870
    %1874 = vst.msk [vmem:[#allocation6] sm:$0xff] %vm154, %v1873
    // Predicated region
    $region14: #{tpu_custom_call.1} parent=1 // pred_check
      _
    $region15: #{tpu_custom_call.1} parent=1 // pred_check_branch
      %1876 = sbr.rel (0) target = $region17
    $region16: #{tpu_custom_call.1} parent=1 // pred_region
      %s1878 = ssub.s32 128, 128
      %1879 = vsyncadd [#allocation3], %s1878
      %s1881 = sshll.u32 [#allocation2], 4
      %s1882 = int_to_ptr.vmem [resolvable:$true] %s1881
      %1884 = dma.vmem_to_hbm [thread:$0]  %s1882, 128, %s2, [#allocation3]
    $region17: #{tpu_custom_call.1} parent=1 // pred_fallthru
      _
    // Predicated region
    $region18: #{tpu_custom_call.1} parent=1 // pred_check
      _
    $region19: #{tpu_custom_call.1} parent=1 // pred_check_branch
      %1886 = sbr.rel (0) target = $region21
    $region20: #{tpu_custom_call.1} parent=1 // pred_region
      %s1888 = ssub.s32 128, 128
      %1889 = vsyncadd [#allocation5], %s1888
      %s1891 = sshll.u32 [#allocation4], 4
      %s1892 = int_to_ptr.vmem [resolvable:$true] %s1891
      %1894 = dma.vmem_to_hbm [thread:$0]  %s1892, 128, %s3, [#allocation5]
    $region21: #{tpu_custom_call.1} parent=1 // pred_fallthru
      _
    // Predicated region
    $region22: #{tpu_custom_call.1} parent=1 // pred_check
      _
    $region23: #{tpu_custom_call.1} parent=1 // pred_check_branch
      %1896 = sbr.rel (0) target = $region25
    $region24: #{tpu_custom_call.1} parent=1 // pred_region
      %s1898 = ssub.s32 128, 128
      %1899 = vsyncadd [#allocation5], %s1898
      %s1901 = sshll.u32 [#allocation6], 4
      %s1902 = int_to_ptr.vmem [resolvable:$true] %s1901
      %1904 = dma.vmem_to_hbm [thread:$0]  %s1902, 128, %s4, [#allocation5]
    $region25: #{tpu_custom_call.1} parent=1 // pred_fallthru
      _
    // Predicated region
    $region26: #{tpu_custom_call.1} parent=1 // pred_check
      _
    $region27: #{tpu_custom_call.1} parent=1 // pred_check_branch
      %1906 = sbr.rel (0) target = $region29
    $region28: #{tpu_custom_call.1} parent=1 // pred_region
      %1907 = dma.done [#allocation3], 128
    $region29: #{tpu_custom_call.1} parent=1 // pred_fallthru
      _
    // Predicated region
    $region30: #{tpu_custom_call.1} parent=1 // pred_check
      _
    $region31: #{tpu_custom_call.1} parent=1 // pred_check_branch
      %1909 = sbr.rel (0) target = $region33
    $region32: #{tpu_custom_call.1} parent=1 // pred_region
      %1910 = dma.done [#allocation5], 128
    $region33: #{tpu_custom_call.1} parent=1 // pred_fallthru
      _
    // Predicated region
    $region34: #{tpu_custom_call.1} parent=1 // pred_check
      _
    $region35: #{tpu_custom_call.1} parent=1 // pred_check_branch
      %1912 = sbr.rel (0) target = $region37
    $region36: #{tpu_custom_call.1} parent=1 // pred_region
      %1913 = dma.done [#allocation5], 128
    $region37: #{tpu_custom_call.1} parent=1 // pred_fallthru
      _
    %1914 = vsyncpa [#allocation3], 1
    %1915 = vsyncpa [#allocation5], 1

</llo_original>
